<compile_context>
chip_gen: v5e
topology: v5e:2x2
jax: 0.10.0
libtpu: 0.0.40
codegen_flags: <defaults>
</compile_context>

<pallas_src>
import functools
import math

import jax
import jax.numpy as jnp
import numpy as np
from jax import lax
from jax.experimental import pallas as pl
from jax.experimental.pallas import tpu as pltpu


# ------------------ kernel A: QKV projection (contraction-tiled) + RoPE ------------------ #
def _qkv_rope_kernel(x_ref, wq_ref, wk_ref, wv_ref, cos_ref, sin_ref,
                     xq_ref, xk_ref, xv_ref, qacc, kacc, vacc,
                     *, n_heads, n_kv_heads, head_dim):
    d = pl.program_id(2)

    @pl.when(d == 0)
    def _():
        qacc[...] = jnp.zeros(qacc.shape, qacc.dtype)
        kacc[...] = jnp.zeros(kacc.shape, kacc.dtype)
        vacc[...] = jnp.zeros(vacc.shape, vacc.dtype)

    x = x_ref[0]                                                        # (ts, tdk) bf16
    qacc[...] += jnp.dot(x, wq_ref[...], preferred_element_type=jnp.float32)
    kacc[...] += jnp.dot(x, wk_ref[...], preferred_element_type=jnp.float32)
    vacc[...] += jnp.dot(x, wv_ref[...], preferred_element_type=jnp.float32)

    @pl.when(d == pl.num_programs(2) - 1)                               # last k-step: RoPE + store
    def _():
        cos = cos_ref[...]                  # (ts, hd) f32  [c0, c0, c1, c1, ...]
        sin = sin_ref[...]                  # (ts, hd) f32  [-s0, +s0, -s1, +s1, ...]
        even = (lax.broadcasted_iota(jnp.int32, cos.shape, 1) % 2) == 0

        def rope(t):
            # interleaved RoPE: out = t * cos_e + pair_swap(t) * sin_signed.
            # pair_swap via parity-select of two XLU lane rotations (wrap lanes are
            # never selected thanks to the parity mask).
            nxt = pltpu.roll(t, shift=head_dim - 1, axis=1)   # == jnp.roll(t, -1, -1)
            prv = pltpu.roll(t, shift=1, axis=1)              # == jnp.roll(t, +1, -1)
            return t * cos + jnp.where(even, nxt, prv) * sin

        q = qacc[...]
        k = kacc[...]
        # per lane-aligned head slice -> no full-width cos/sin temporaries.
        for h in range(n_heads):
            sl = slice(h * head_dim, (h + 1) * head_dim)
            xq_ref[0, :, sl] = rope(q[:, sl]).astype(xq_ref.dtype)
        for h in range(n_kv_heads):
            sl = slice(h * head_dim, (h + 1) * head_dim)
            xk_ref[0, :, sl] = rope(k[:, sl]).astype(xk_ref.dtype)
        xv_ref[0] = vacc[...].astype(xv_ref.dtype)


# ----------- kernel B: causal GQA flash attention over a triangular (q, kv) grid ---------- #
def _flash_gqa_kernel(qidx_ref, kidx_ref, xq_ref, xk_ref, xv_ref, xo_ref,
                      m_sc, l_sc, acc_sc, *, n_rep, head_dim, exp_dtype):
    t = pl.program_id(2)
    q_blk = qidx_ref[t]
    kv_blk = kidx_ref[t]

    @pl.when(kv_blk == 0)                 # first kv block of a new q block: reset state
    def _():
        m_sc[...] = jnp.full(m_sc.shape, -jnp.inf, m_sc.dtype)
        l_sc[...] = jnp.zeros(l_sc.shape, l_sc.dtype)
        acc_sc[...] = jnp.zeros(acc_sc.shape, acc_sc.dtype)

    k = xk_ref[0]                         # (tk, hd) bf16 -- fetched ONCE for the whole group
    v = xv_ref[0]                         # (tk, hd) bf16
    q_all = xq_ref[0]                     # (tq, n_rep*hd) bf16, pre-scaled by 1/sqrt(hd)

    def update(masked):
        for r in range(n_rep):            # all q heads sharing this kv head
            q = q_all[:, r * head_dim:(r + 1) * head_dim]
            s = lax.dot_general(q, k, (((1,), (1,)), ((), ())),
                                preferred_element_type=jnp.float32)     # (tq, tk) f32
            if masked:                    # causal mask only on the diagonal block (tq == tk)
                row = lax.broadcasted_iota(jnp.int32, s.shape, 0)
                col = lax.broadcasted_iota(jnp.int32, s.shape, 1)
                s = jnp.where(row >= col, s, -1e30)
            m_prev = m_sc[r]
            m_new = jnp.maximum(m_prev, s.max(axis=-1, keepdims=True))
            alpha = jnp.exp(m_prev - m_new)
            p = jnp.exp((s - m_new).astype(exp_dtype))                  # bf16 EUP on v6e/v7x
            l_sc[r] = alpha * l_sc[r] + jnp.sum(p.astype(jnp.float32),
                                                axis=-1, keepdims=True)
            acc_sc[r] = alpha * acc_sc[r] + jnp.dot(
                p.astype(v.dtype), v, preferred_element_type=jnp.float32)
            m_sc[r] = m_new

    @pl.when(kv_blk < q_blk)              # strictly below diagonal: no mask work at all
    def _():
        update(masked=False)

    @pl.when(kv_blk == q_blk)             # diagonal block: mask, then finalize this q block
    def _():
        update(masked=True)
        for r in range(n_rep):
            inv_l = pl.reciprocal(l_sc[r], approx=True)
            xo_ref[0, :, r * head_dim:(r + 1) * head_dim] = (
                acc_sc[r] * inv_l).astype(xo_ref.dtype)


# -------------------------- kernel C: output projection GEMM ----------------------------- #
def _out_proj_kernel(xo_ref, wo_ref, o_ref):
    o_ref[0] = jnp.dot(xo_ref[0], wo_ref[...],
                       preferred_element_type=jnp.float32).astype(o_ref.dtype)


# ---------------------------------------- wrapper ---------------------------------------- #
def attention_pallas(x, wq, wk, wv, wo, freqs_cos, freqs_sin, *,
                     n_heads, n_kv_heads,
                     block_q=256, block_seq=256, block_dk=1024, block_n=512,
                     exp_dtype=None):
    bsz, seq, dim = x.shape
    head_dim = dim // n_heads
    assert n_heads % n_kv_heads == 0 and head_dim % 2 == 0
    n_rep = n_heads // n_kv_heads
    Dq = n_heads * head_dim
    Dk = n_kv_heads * head_dim

    if exp_dtype is None:
        # bf16 exp relieves the single EUP on v6e/v7x; v5e and older have no bf16 EUP.
        try:
            kind = jax.devices()[0].device_kind.lower()
        except Exception:
            kind = ""
        exp_dtype = (jnp.float32 if any(v in kind for v in ("v2", "v3", "v4", "v5"))
                     else jnp.bfloat16)

    ts = min(block_seq, seq)
    tq = min(block_q, seq)
    tk = tq                               # diagonal-only masking assumes square q/kv blocks
    tdk = min(block_dk, dim)
    tn = min(block_n, dim)
    assert seq % ts == 0 and seq % tq == 0 and dim % tdk == 0 and dim % tn == 0

    scale = 1.0 / math.sqrt(head_dim)

    # host-side glue (tiny): interleaved-RoPE coefficient tables at (seq, head_dim)
    cos_e = jnp.repeat(freqs_cos.astype(jnp.float32), 2, axis=-1)
    sin_signed = jnp.stack([-freqs_sin, freqs_sin], axis=-1).reshape(seq, head_dim)
    sin_signed = sin_signed.astype(jnp.float32)

    # bf16 MXU operands; fold the 1/sqrt(head_dim) score scale into wq (RoPE is linear).
    x_bf = x.astype(jnp.bfloat16)
    wq_bf = (wq * scale).astype(jnp.bfloat16)
    wk_bf = wk.astype(jnp.bfloat16)
    wv_bf = wv.astype(jnp.bfloat16)
    wo_bf = wo.astype(jnp.bfloat16)

    vmem_lim = 64 * 1024 * 1024           # <= physical VMEM on every generation (v7x: 64 MiB)

    # ---- kernel A: QKV projection + rotary -> bf16 activations in HBM ----
    n_s = seq // ts
    n_d = dim // tdk
    cost_a = pl.CostEstimate(
        flops=2 * bsz * seq * dim * (Dq + 2 * Dk),
        transcendentals=0,
        bytes_accessed=2 * (bsz * seq * dim + bsz * seq * (Dq + 2 * Dk)
                            + bsz * n_s * dim * (Dq + 2 * Dk)))
    xq, xk, xv = pl.pallas_call(
        functools.partial(_qkv_rope_kernel, n_heads=n_heads,
                          n_kv_heads=n_kv_heads, head_dim=head_dim),
        out_shape=(jax.ShapeDtypeStruct((bsz, seq, Dq), jnp.bfloat16),
                   jax.ShapeDtypeStruct((bsz, seq, Dk), jnp.bfloat16),
                   jax.ShapeDtypeStruct((bsz, seq, Dk), jnp.bfloat16)),
        grid=(bsz, n_s, n_d),
        in_specs=[
            pl.BlockSpec((1, ts, tdk), lambda b, s, d: (b, s, d)),      # x
            pl.BlockSpec((tdk, Dq), lambda b, s, d: (d, 0)),            # wq (pre-scaled)
            pl.BlockSpec((tdk, Dk), lambda b, s, d: (d, 0)),            # wk
            pl.BlockSpec((tdk, Dk), lambda b, s, d: (d, 0)),            # wv
            pl.BlockSpec((ts, head_dim), lambda b, s, d: (s, 0)),       # cos_e
            pl.BlockSpec((ts, head_dim), lambda b, s, d: (s, 0)),       # sin_signed
        ],
        out_specs=(
            pl.BlockSpec((1, ts, Dq), lambda b, s, d: (b, s, 0)),
            pl.BlockSpec((1, ts, Dk), lambda b, s, d: (b, s, 0)),
            pl.BlockSpec((1, ts, Dk), lambda b, s, d: (b, s, 0)),
        ),
        scratch_shapes=[pltpu.VMEM((ts, Dq), jnp.float32),
                        pltpu.VMEM((ts, Dk), jnp.float32),
                        pltpu.VMEM((ts, Dk), jnp.float32)],
        compiler_params=pltpu.CompilerParams(
            dimension_semantics=("parallel", "parallel", "arbitrary"),
            vmem_limit_bytes=vmem_lim),
        cost_estimate=cost_a,
    )(x_bf, wq_bf, wk_bf, wv_bf, cos_e, sin_signed)

    # ---- kernel B: GQA flash attention (triangular grid, one K/V fetch per group) ----
    n_q = seq // tq
    tri = [(q, kv) for q in range(n_q) for kv in range(q + 1)]   # kv innermost, ascending
    n_tri = len(tri)
    qidx = jnp.asarray([q for q, _ in tri], jnp.int32)
    kidx = jnp.asarray([kv for _, kv in tri], jnp.int32)

    cost_b = pl.CostEstimate(
        flops=4 * bsz * n_heads * (seq * seq // 2) * head_dim,
        transcendentals=bsz * n_heads * (seq * seq // 2),
        bytes_accessed=2 * (2 * bsz * seq * Dq
                            + 2 * bsz * n_kv_heads * n_tri * tk * head_dim))
    xo = pl.pallas_call(
        functools.partial(_flash_gqa_kernel, n_rep=n_rep, head_dim=head_dim,
                          exp_dtype=exp_dtype),
        out_shape=jax.ShapeDtypeStruct((bsz, seq, Dq), jnp.bfloat16),
        grid_spec=pltpu.PrefetchScalarGridSpec(
            num_scalar_prefetch=2,
            grid=(bsz, n_kv_heads, n_tri),
            in_specs=[
                # Q tile of the whole GQA group (heads g*n_rep .. g*n_rep+n_rep-1)
                pl.BlockSpec((1, tq, n_rep * head_dim),
                             lambda b, g, t, qi, ki: (b, qi[t], g)),
                pl.BlockSpec((1, tk, head_dim),
                             lambda b, g, t, qi, ki: (b, ki[t], g)),
                pl.BlockSpec((1, tk, head_dim),
                             lambda b, g, t, qi, ki: (b, ki[t], g)),
            ],
            out_specs=pl.BlockSpec((1, tq, n_rep * head_dim),
                                   lambda b, g, t, qi, ki: (b, qi[t], g)),
            scratch_shapes=[pltpu.VMEM((n_rep, tq, 1), jnp.float32),        # running max m
                            pltpu.VMEM((n_rep, tq, 1), jnp.float32),        # running sum l
                            pltpu.VMEM((n_rep, tq, head_dim), jnp.float32)]  # o accumulator
        ),
        compiler_params=pltpu.CompilerParams(
            dimension_semantics=("parallel", "parallel", "arbitrary"),
            vmem_limit_bytes=vmem_lim),
        cost_estimate=cost_b,
    )(qidx, kidx, xq, xk, xv)

    # ---- kernel C: output projection (lane-dense GEMM, full-depth contraction) ----
    n_n = dim // tn
    cost_c = pl.CostEstimate(
        flops=2 * bsz * seq * Dq * dim,
        transcendentals=0,
        bytes_accessed=2 * bsz * seq * Dq + 2 * bsz * n_s * Dq * dim + 4 * bsz * seq * dim)
    out = pl.pallas_call(
        _out_proj_kernel,
        out_shape=jax.ShapeDtypeStruct((bsz, seq, dim), x.dtype),
        grid=(bsz, n_s, n_n),
        in_specs=[
            pl.BlockSpec((1, ts, Dq), lambda b, s, n: (b, s, 0)),
            pl.BlockSpec((Dq, tn), lambda b, s, n: (0, n)),
        ],
        out_specs=pl.BlockSpec((1, ts, tn), lambda b, s, n: (b, s, n)),
        compiler_params=pltpu.CompilerParams(
            dimension_semantics=("parallel", "parallel", "parallel"),
            vmem_limit_bytes=vmem_lim),
        cost_estimate=cost_c,
    )(xo, wo_bf)
    return out


# ------------------------------------ pure-JAX reference --------------------------------- #
def attention_ref(x, wq, wk, wv, wo, freqs_cos, freqs_sin, *, n_heads, n_kv_heads):
    bsz, seq, dim = x.shape
    hd = dim // n_heads
    n_rep = n_heads // n_kv_heads
    xq = (x @ wq).reshape(bsz, seq, n_heads, hd)
    xk = (x @ wk).reshape(bsz, seq, n_kv_heads, hd)
    xv = (x @ wv).reshape(bsz, seq, n_kv_heads, hd)

    def rope(t):
        tr = t.reshape(t.shape[:-1] + (hd // 2, 2))
        r, i = tr[..., 0], tr[..., 1]
        c = freqs_cos[None, :, None, :]
        s = freqs_sin[None, :, None, :]
        return jnp.stack([r * c - i * s, r * s + i * c], axis=-1).reshape(t.shape)

    xq, xk = rope(xq), rope(xk)
    xk = jnp.repeat(xk, n_rep, axis=2)
    xv = jnp.repeat(xv, n_rep, axis=2)
    xq, xk, xv = (t.transpose(0, 2, 1, 3) for t in (xq, xk, xv))
    s = jnp.einsum('bhqd,bhkd->bhqk', xq, xk) / math.sqrt(hd)
    mask = jnp.tril(jnp.ones((seq, seq), bool))
    s = jnp.where(mask[None, None], s, -jnp.inf)
    p = jax.nn.softmax(s, axis=-1)
    o = jnp.einsum('bhqk,bhkd->bhqd', p, xv)
    o = o.transpose(0, 2, 1, 3).reshape(bsz, seq, n_heads * hd)
    return o @ wo


# ------------------------------------------- main ---------------------------------------- #
if __name__ == "__main__":
    # small but TPU-layout-friendly shapes consistent with the module
    # (head_dim=128 as in ModelArgs, GQA with n_rep=2, short sequence).
    bsz, seq = 2, 16
    n_heads, n_kv_heads, head_dim = 4, 2, 128
    dim = n_heads * head_dim                     # 512

    key = jax.random.PRNGKey(0)
    kx, kq, kk, kv, ko = jax.random.split(key, 5)
    wscale = 1.0 / math.sqrt(dim)
    x = jax.random.normal(kx, (bsz, seq, dim), jnp.float32)
    wq = jax.random.normal(kq, (dim, n_heads * head_dim), jnp.float32) * wscale
    wk = jax.random.normal(kk, (dim, n_kv_heads * head_dim), jnp.float32) * wscale
    wv = jax.random.normal(kv, (dim, n_kv_heads * head_dim), jnp.float32) * wscale
    wo = jax.random.normal(ko, (n_heads * head_dim, dim), jnp.float32) * wscale

    # standard RoPE frequencies: shape (seq, head_dim // 2)
    inv_freq = 1.0 / (10000.0 ** (np.arange(0, head_dim, 2, dtype=np.float32) / head_dim))
    t = np.arange(seq, dtype=np.float32)
    angles = np.outer(t, inv_freq)
    freqs_cos = jnp.asarray(np.cos(angles), jnp.float32)
    freqs_sin = jnp.asarray(np.sin(angles), jnp.float32)

    out = attention_pallas(x, wq, wk, wv, wo, freqs_cos, freqs_sin,
                           n_heads=n_heads, n_kv_heads=n_kv_heads)
    out = jax.block_until_ready(out)

    ref = attention_ref(x, wq, wk, wv, wo, freqs_cos, freqs_sin,
                        n_heads=n_heads, n_kv_heads=n_kv_heads)
    ref = jax.block_until_ready(ref)

    assert out.shape == (bsz, seq, dim)
    # bf16 MXU operands + bf16 exp (on v6e/v7x) vs an all-f32 reference -> relaxed tolerance
    np.testing.assert_allclose(np.asarray(out), np.asarray(ref), rtol=5e-2, atol=5e-2)
    print("KERNEL_OK")
</pallas_src>

<mosaic_0001>
module attributes {stable_mosaic.version = 11 : i64} {
  func.func @_qkv_rope_kernel(%arg0: i32, %arg1: i32, %arg2: i32, %arg3: memref<1x16x512xbf16, #tpu.memory_space<vmem>>, %arg4: memref<512x512xbf16, #tpu.memory_space<vmem>>, %arg5: memref<512x256xbf16, #tpu.memory_space<vmem>>, %arg6: memref<512x256xbf16, #tpu.memory_space<vmem>>, %arg7: memref<16x128xf32, #tpu.memory_space<vmem>>, %arg8: memref<16x128xf32, #tpu.memory_space<vmem>>, %arg9: memref<1x16x512xbf16, #tpu.memory_space<vmem>>, %arg10: memref<1x16x256xbf16, #tpu.memory_space<vmem>>, %arg11: memref<1x16x256xbf16, #tpu.memory_space<vmem>>, %arg12: memref<16x512xf32, #tpu.memory_space<vmem>>, %arg13: memref<16x256xf32, #tpu.memory_space<vmem>>, %arg14: memref<16x256xf32, #tpu.memory_space<vmem>>) attributes {dimension_semantics = [#tpu.dimension_semantics<parallel>, #tpu.dimension_semantics<parallel>, #tpu.dimension_semantics<arbitrary>], iteration_bounds = array<i64: 2, 1, 1>, scalar_prefetch = 0 : i64, scratch_operands = 3 : i64, tpu.core_type = #tpu.core_type<tc>, window_params = [{transform_indices = @transform_0, window_bounds = array<i64: 1, 16, 512>}, {transform_indices = @transform_1, window_bounds = array<i64: 512, 512>}, {transform_indices = @transform_2, window_bounds = array<i64: 512, 256>}, {transform_indices = @transform_3, window_bounds = array<i64: 512, 256>}, {transform_indices = @transform_4, window_bounds = array<i64: 16, 128>}, {transform_indices = @transform_5, window_bounds = array<i64: 16, 128>}, {transform_indices = @transform_6, window_bounds = array<i64: 1, 16, 512>}, {transform_indices = @transform_7, window_bounds = array<i64: 1, 16, 256>}, {transform_indices = @transform_8, window_bounds = array<i64: 1, 16, 256>}]} {
    %c0_i32 = arith.constant 0 : i32
    %0 = arith.cmpi eq, %arg2, %c0_i32 : i32
    %1 = arith.extui %0 : i1 to i32
    %c0_i32_0 = arith.constant 0 : i32
    %2 = arith.cmpi ne, %1, %c0_i32_0 : i32
    scf.if %2 {
      %cst_25 = arith.constant 0.000000e+00 : f32
      %23 = vector.broadcast %cst_25 : f32 to vector<16x512xf32>
      %c0_26 = arith.constant 0 : index
      %c0_27 = arith.constant 0 : index
      %24 = vector.load %arg12[%c0_26, %c0_27] : memref<16x512xf32, #tpu.memory_space<vmem>>, vector<16x512xf32>
      tpu.vector_store %arg12[%c0_26, %c0_27], %23 {strides = array<i32>} : memref<16x512xf32, #tpu.memory_space<vmem>>, vector<16x512xf32>,
      %cst_28 = arith.constant 0.000000e+00 : f32
      %25 = vector.broadcast %cst_28 : f32 to vector<16x256xf32>
      %c0_29 = arith.constant 0 : index
      %c0_30 = arith.constant 0 : index
      %26 = vector.load %arg13[%c0_29, %c0_30] : memref<16x256xf32, #tpu.memory_space<vmem>>, vector<16x256xf32>
      tpu.vector_store %arg13[%c0_29, %c0_30], %25 {strides = array<i32>} : memref<16x256xf32, #tpu.memory_space<vmem>>, vector<16x256xf32>,
      %cst_31 = arith.constant 0.000000e+00 : f32
      %27 = vector.broadcast %cst_31 : f32 to vector<16x256xf32>
      %c0_32 = arith.constant 0 : index
      %c0_33 = arith.constant 0 : index
      %28 = vector.load %arg14[%c0_32, %c0_33] : memref<16x256xf32, #tpu.memory_space<vmem>>, vector<16x256xf32>
      tpu.vector_store %arg14[%c0_32, %c0_33], %27 {strides = array<i32>} : memref<16x256xf32, #tpu.memory_space<vmem>>, vector<16x256xf32>,
    } else {
    }
    %c0 = arith.constant 0 : index
    %c0_1 = arith.constant 0 : index
    %c0_2 = arith.constant 0 : index
    %3 = vector.load %arg3[%c0, %c0_1, %c0_2] : memref<1x16x512xbf16, #tpu.memory_space<vmem>>, vector<1x16x512xbf16>
    %4 = vector.shape_cast %3 : vector<1x16x512xbf16> to vector<16x512xbf16>
    %c0_3 = arith.constant 0 : index
    %c0_4 = arith.constant 0 : index
    %5 = vector.load %arg12[%c0_3, %c0_4] : memref<16x512xf32, #tpu.memory_space<vmem>>, vector<16x512xf32>
    %c0_5 = arith.constant 0 : index
    %c0_6 = arith.constant 0 : index
    %6 = vector.load %arg4[%c0_5, %c0_6] : memref<512x512xbf16, #tpu.memory_space<vmem>>, vector<512x512xbf16>
    %cst = arith.constant dense<0.000000e+00> : vector<16x512xf32>
    %7 = tpu.matmul %4, %6, %cst {dimension_numbers = #tpu.dot_dimension_numbers<[1], [0], [0], [1], [0, 0, 1, 1], [], []>} : vector<16x512xbf16>, vector<512x512xbf16>, vector<16x512xf32> -> vector<16x512xf32>
    %8 = arith.addf %5, %7 : vector<16x512xf32>
    %c0_7 = arith.constant 0 : index
    %c0_8 = arith.constant 0 : index
    %9 = vector.load %arg12[%c0_7, %c0_8] : memref<16x512xf32, #tpu.memory_space<vmem>>, vector<16x512xf32>
    tpu.vector_store %arg12[%c0_7, %c0_8], %8 {strides = array<i32>} : memref<16x512xf32, #tpu.memory_space<vmem>>, vector<16x512xf32>,
    %c0_9 = arith.constant 0 : index
    %c0_10 = arith.constant 0 : index
    %10 = vector.load %arg13[%c0_9, %c0_10] : memref<16x256xf32, #tpu.memory_space<vmem>>, vector<16x256xf32>
    %c0_11 = arith.constant 0 : index
    %c0_12 = arith.constant 0 : index
    %11 = vector.load %arg5[%c0_11, %c0_12] : memref<512x256xbf16, #tpu.memory_space<vmem>>, vector<512x256xbf16>
    %cst_13 = arith.constant dense<0.000000e+00> : vector<16x256xf32>
    %12 = tpu.matmul %4, %11, %cst_13 {dimension_numbers = #tpu.dot_dimension_numbers<[1], [0], [0], [1], [0, 0, 1, 1], [], []>} : vector<16x512xbf16>, vector<512x256xbf16>, vector<16x256xf32> -> vector<16x256xf32>
    %13 = arith.addf %10, %12 : vector<16x256xf32>
    %c0_14 = arith.constant 0 : index
    %c0_15 = arith.constant 0 : index
    %14 = vector.load %arg13[%c0_14, %c0_15] : memref<16x256xf32, #tpu.memory_space<vmem>>, vector<16x256xf32>
    tpu.vector_store %arg13[%c0_14, %c0_15], %13 {strides = array<i32>} : memref<16x256xf32, #tpu.memory_space<vmem>>, vector<16x256xf32>,
    %c0_16 = arith.constant 0 : index
    %c0_17 = arith.constant 0 : index
    %15 = vector.load %arg14[%c0_16, %c0_17] : memref<16x256xf32, #tpu.memory_space<vmem>>, vector<16x256xf32>
    %c0_18 = arith.constant 0 : index
    %c0_19 = arith.constant 0 : index
    %16 = vector.load %arg6[%c0_18, %c0_19] : memref<512x256xbf16, #tpu.memory_space<vmem>>, vector<512x256xbf16>
    %cst_20 = arith.constant dense<0.000000e+00> : vector<16x256xf32>
    %17 = tpu.matmul %4, %16, %cst_20 {dimension_numbers = #tpu.dot_dimension_numbers<[1], [0], [0], [1], [0, 0, 1, 1], [], []>} : vector<16x512xbf16>, vector<512x256xbf16>, vector<16x256xf32> -> vector<16x256xf32>
    %18 = arith.addf %15, %17 : vector<16x256xf32>
    %c0_21 = arith.constant 0 : index
    %c0_22 = arith.constant 0 : index
    %19 = vector.load %arg14[%c0_21, %c0_22] : memref<16x256xf32, #tpu.memory_space<vmem>>, vector<16x256xf32>
    tpu.vector_store %arg14[%c0_21, %c0_22], %18 {strides = array<i32>} : memref<16x256xf32, #tpu.memory_space<vmem>>, vector<16x256xf32>,
    %c0_i32_23 = arith.constant 0 : i32
    %20 = arith.cmpi eq, %arg2, %c0_i32_23 : i32
    %21 = arith.extui %20 : i1 to i32
    %c0_i32_24 = arith.constant 0 : i32
    %22 = arith.cmpi ne, %21, %c0_i32_24 : i32
    scf.if %22 {
      %c0_25 = arith.constant 0 : index
      %c0_26 = arith.constant 0 : index
      %23 = vector.load %arg7[%c0_25, %c0_26] : memref<16x128xf32, #tpu.memory_space<vmem>>, vector<16x128xf32>
      %c0_27 = arith.constant 0 : index
      %c0_28 = arith.constant 0 : index
      %24 = vector.load %arg8[%c0_27, %c0_28] : memref<16x128xf32, #tpu.memory_space<vmem>>, vector<16x128xf32>
      %25 = tpu.iota {dimensions = array<i32: 1>} : vector<16x128xi32>
      %c2_i32 = arith.constant 2 : i32
      %c0_i32_29 = arith.constant 0 : i32
      %26 = arith.cmpi eq, %c2_i32, %c0_i32_29 : i32
      %c1_i32 = arith.constant 1 : i32
      %27 = arith.select %26, %c1_i32, %c2_i32 : i32
      %28 = vector.broadcast %27 : i32 to vector<16x128xi32>
      %29 = arith.remsi %25, %28 : vector<16x128xi32>
      %c0_i32_30 = arith.constant 0 : i32
      %30 = vector.broadcast %c0_i32_30 : i32 to vector<16x128xi32>
      %31 = arith.cmpi ne, %29, %30 : vector<16x128xi32>
      %c0_i32_31 = arith.constant 0 : i32
      %32 = vector.broadcast %c0_i32_31 : i32 to vector<16x128xi32>
      %33 = arith.cmpi slt, %29, %32 : vector<16x128xi32>
      %c0_i32_32 = arith.constant 0 : i32
      %34 = arith.cmpi slt, %27, %c0_i32_32 : i32
      %35 = vector.broadcast %34 : i1 to vector<16x128xi1>
      %36 = vector.broadcast %35 : vector<16x128xi1> to vector<16x128xi1>
      %37 = arith.xori %33, %36 : vector<16x128xi1>
      %38 = arith.andi %37, %31 : vector<16x128xi1>
      %39 = vector.broadcast %27 : i32 to vector<16x128xi32>
      %40 = arith.addi %29, %39 : vector<16x128xi32>
      %41 = arith.select %38, %40, %29 : vector<16x128xi1>, vector<16x128xi32>
      %c0_i32_33 = arith.constant 0 : i32
      %42 = vector.broadcast %c0_i32_33 : i32 to vector<16x128xi32>
      %43 = arith.cmpi eq, %41, %42 : vector<16x128xi32>
      %c0_34 = arith.constant 0 : index
      %c0_35 = arith.constant 0 : index
      %44 = vector.load %arg12[%c0_34, %c0_35] : memref<16x512xf32, #tpu.memory_space<vmem>>, vector<16x512xf32>
      %c0_36 = arith.constant 0 : index
      %c0_37 = arith.constant 0 : index
      %45 = vector.load %arg13[%c0_36, %c0_37] : memref<16x256xf32, #tpu.memory_space<vmem>>, vector<16x256xf32>
      %46 = vector.extract_strided_slice %44 {offsets = [0, 0], sizes = [16, 128], strides = [1, 1]} : vector<16x512xf32> to vector<16x128xf32>
      %c127_i32 = arith.constant 127 : i32
      %47 = tpu.dynamic_rotate %46 by %c127_i32 dim 1 : vector<16x128xf32>, i32 -> vector<16x128xf32>
      %c1_i32_38 = arith.constant 1 : i32
      %48 = tpu.dynamic_rotate %46 by %c1_i32_38 dim 1 : vector<16x128xf32>, i32 -> vector<16x128xf32>
      %49 = arith.mulf %46, %23 : vector<16x128xf32>
      %50 = arith.select %43, %47, %48 : vector<16x128xi1>, vector<16x128xf32>
      %51 = arith.mulf %50, %24 : vector<16x128xf32>
      %52 = arith.addf %49, %51 : vector<16x128xf32>
      %53 = arith.truncf %52 : vector<16x128xf32> to vector<16x128xbf16>
      %c0_39 = arith.constant 0 : index
      %c0_40 = arith.constant 0 : index
      %c0_41 = arith.constant 0 : index
      %54 = vector.load %arg9[%c0_39, %c0_40, %c0_41] : memref<1x16x512xbf16, #tpu.memory_space<vmem>>, vector<1x16x128xbf16>
      %55 = vector.shape_cast %54 : vector<1x16x128xbf16> to vector<16x128xbf16>
      %56 = vector.shape_cast %53 : vector<16x128xbf16> to vector<1x16x128xbf16>
      tpu.vector_store %arg9[%c0_39, %c0_40, %c0_41], %56 {strides = array<i32>} : memref<1x16x512xbf16, #tpu.memory_space<vmem>>, vector<1x16x128xbf16>,
      %57 = vector.extract_strided_slice %44 {offsets = [0, 128], sizes = [16, 128], strides = [1, 1]} : vector<16x512xf32> to vector<16x128xf32>
      %c127_i32_42 = arith.constant 127 : i32
      %58 = tpu.dynamic_rotate %57 by %c127_i32_42 dim 1 : vector<16x128xf32>, i32 -> vector<16x128xf32>
      %c1_i32_43 = arith.constant 1 : i32
      %59 = tpu.dynamic_rotate %57 by %c1_i32_43 dim 1 : vector<16x128xf32>, i32 -> vector<16x128xf32>
      %60 = arith.mulf %57, %23 : vector<16x128xf32>
      %61 = arith.select %43, %58, %59 : vector<16x128xi1>, vector<16x128xf32>
      %62 = arith.mulf %61, %24 : vector<16x128xf32>
      %63 = arith.addf %60, %62 : vector<16x128xf32>
      %64 = arith.truncf %63 : vector<16x128xf32> to vector<16x128xbf16>
      %c0_44 = arith.constant 0 : index
      %c0_45 = arith.constant 0 : index
      %c128 = arith.constant 128 : index
      %65 = vector.load %arg9[%c0_44, %c0_45, %c128] : memref<1x16x512xbf16, #tpu.memory_space<vmem>>, vector<1x16x128xbf16>
      %66 = vector.shape_cast %65 : vector<1x16x128xbf16> to vector<16x128xbf16>
      %67 = vector.shape_cast %64 : vector<16x128xbf16> to vector<1x16x128xbf16>
      tpu.vector_store %arg9[%c0_44, %c0_45, %c128], %67 {strides = array<i32>} : memref<1x16x512xbf16, #tpu.memory_space<vmem>>, vector<1x16x128xbf16>,
      %68 = vector.extract_strided_slice %44 {offsets = [0, 256], sizes = [16, 128], strides = [1, 1]} : vector<16x512xf32> to vector<16x128xf32>
      %c127_i32_46 = arith.constant 127 : i32
      %69 = tpu.dynamic_rotate %68 by %c127_i32_46 dim 1 : vector<16x128xf32>, i32 -> vector<16x128xf32>
      %c1_i32_47 = arith.constant 1 : i32
      %70 = tpu.dynamic_rotate %68 by %c1_i32_47 dim 1 : vector<16x128xf32>, i32 -> vector<16x128xf32>
      %71 = arith.mulf %68, %23 : vector<16x128xf32>
      %72 = arith.select %43, %69, %70 : vector<16x128xi1>, vector<16x128xf32>
      %73 = arith.mulf %72, %24 : vector<16x128xf32>
      %74 = arith.addf %71, %73 : vector<16x128xf32>
      %75 = arith.truncf %74 : vector<16x128xf32> to vector<16x128xbf16>
      %c0_48 = arith.constant 0 : index
      %c0_49 = arith.constant 0 : index
      %c256 = arith.constant 256 : index
      %76 = vector.load %arg9[%c0_48, %c0_49, %c256] : memref<1x16x512xbf16, #tpu.memory_space<vmem>>, vector<1x16x128xbf16>
      %77 = vector.shape_cast %76 : vector<1x16x128xbf16> to vector<16x128xbf16>
      %78 = vector.shape_cast %75 : vector<16x128xbf16> to vector<1x16x128xbf16>
      tpu.vector_store %arg9[%c0_48, %c0_49, %c256], %78 {strides = array<i32>} : memref<1x16x512xbf16, #tpu.memory_space<vmem>>, vector<1x16x128xbf16>,
      %79 = vector.extract_strided_slice %44 {offsets = [0, 384], sizes = [16, 128], strides = [1, 1]} : vector<16x512xf32> to vector<16x128xf32>
      %c127_i32_50 = arith.constant 127 : i32
      %80 = tpu.dynamic_rotate %79 by %c127_i32_50 dim 1 : vector<16x128xf32>, i32 -> vector<16x128xf32>
      %c1_i32_51 = arith.constant 1 : i32
      %81 = tpu.dynamic_rotate %79 by %c1_i32_51 dim 1 : vector<16x128xf32>, i32 -> vector<16x128xf32>
      %82 = arith.mulf %79, %23 : vector<16x128xf32>
      %83 = arith.select %43, %80, %81 : vector<16x128xi1>, vector<16x128xf32>
      %84 = arith.mulf %83, %24 : vector<16x128xf32>
      %85 = arith.addf %82, %84 : vector<16x128xf32>
      %86 = arith.truncf %85 : vector<16x128xf32> to vector<16x128xbf16>
      %c0_52 = arith.constant 0 : index
      %c0_53 = arith.constant 0 : index
      %c384 = arith.constant 384 : index
      %87 = vector.load %arg9[%c0_52, %c0_53, %c384] : memref<1x16x512xbf16, #tpu.memory_space<vmem>>, vector<1x16x128xbf16>
      %88 = vector.shape_cast %87 : vector<1x16x128xbf16> to vector<16x128xbf16>
      %89 = vector.shape_cast %86 : vector<16x128xbf16> to vector<1x16x128xbf16>
      tpu.vector_store %arg9[%c0_52, %c0_53, %c384], %89 {strides = array<i32>} : memref<1x16x512xbf16, #tpu.memory_space<vmem>>, vector<1x16x128xbf16>,
      %90 = vector.extract_strided_slice %45 {offsets = [0, 0], sizes = [16, 128], strides = [1, 1]} : vector<16x256xf32> to vector<16x128xf32>
      %c127_i32_54 = arith.constant 127 : i32
      %91 = tpu.dynamic_rotate %90 by %c127_i32_54 dim 1 : vector<16x128xf32>, i32 -> vector<16x128xf32>
      %c1_i32_55 = arith.constant 1 : i32
      %92 = tpu.dynamic_rotate %90 by %c1_i32_55 dim 1 : vector<16x128xf32>, i32 -> vector<16x128xf32>
      %93 = arith.mulf %90, %23 : vector<16x128xf32>
      %94 = arith.select %43, %91, %92 : vector<16x128xi1>, vector<16x128xf32>
      %95 = arith.mulf %94, %24 : vector<16x128xf32>
      %96 = arith.addf %93, %95 : vector<16x128xf32>
      %97 = arith.truncf %96 : vector<16x128xf32> to vector<16x128xbf16>
      %c0_56 = arith.constant 0 : index
      %c0_57 = arith.constant 0 : index
      %c0_58 = arith.constant 0 : index
      %98 = vector.load %arg10[%c0_56, %c0_57, %c0_58] : memref<1x16x256xbf16, #tpu.memory_space<vmem>>, vector<1x16x128xbf16>
      %99 = vector.shape_cast %98 : vector<1x16x128xbf16> to vector<16x128xbf16>
      %100 = vector.shape_cast %97 : vector<16x128xbf16> to vector<1x16x128xbf16>
      tpu.vector_store %arg10[%c0_56, %c0_57, %c0_58], %100 {strides = array<i32>} : memref<1x16x256xbf16, #tpu.memory_space<vmem>>, vector<1x16x128xbf16>,
      %101 = vector.extract_strided_slice %45 {offsets = [0, 128], sizes = [16, 128], strides = [1, 1]} : vector<16x256xf32> to vector<16x128xf32>
      %c127_i32_59 = arith.constant 127 : i32
      %102 = tpu.dynamic_rotate %101 by %c127_i32_59 dim 1 : vector<16x128xf32>, i32 -> vector<16x128xf32>
      %c1_i32_60 = arith.constant 1 : i32
      %103 = tpu.dynamic_rotate %101 by %c1_i32_60 dim 1 : vector<16x128xf32>, i32 -> vector<16x128xf32>
      %104 = arith.mulf %101, %23 : vector<16x128xf32>
      %105 = arith.select %43, %102, %103 : vector<16x128xi1>, vector<16x128xf32>
      %106 = arith.mulf %105, %24 : vector<16x128xf32>
      %107 = arith.addf %104, %106 : vector<16x128xf32>
      %108 = arith.truncf %107 : vector<16x128xf32> to vector<16x128xbf16>
      %c0_61 = arith.constant 0 : index
      %c0_62 = arith.constant 0 : index
      %c128_63 = arith.constant 128 : index
      %109 = vector.load %arg10[%c0_61, %c0_62, %c128_63] : memref<1x16x256xbf16, #tpu.memory_space<vmem>>, vector<1x16x128xbf16>
      %110 = vector.shape_cast %109 : vector<1x16x128xbf16> to vector<16x128xbf16>
      %111 = vector.shape_cast %108 : vector<16x128xbf16> to vector<1x16x128xbf16>
      tpu.vector_store %arg10[%c0_61, %c0_62, %c128_63], %111 {strides = array<i32>} : memref<1x16x256xbf16, #tpu.memory_space<vmem>>, vector<1x16x128xbf16>,
      %c0_64 = arith.constant 0 : index
      %c0_65 = arith.constant 0 : index
      %112 = vector.load %arg14[%c0_64, %c0_65] : memref<16x256xf32, #tpu.memory_space<vmem>>, vector<16x256xf32>
      %113 = arith.truncf %112 : vector<16x256xf32> to vector<16x256xbf16>
      %c0_66 = arith.constant 0 : index
      %c0_67 = arith.constant 0 : index
      %c0_68 = arith.constant 0 : index
      %114 = vector.load %arg11[%c0_66, %c0_67, %c0_68] : memref<1x16x256xbf16, #tpu.memory_space<vmem>>, vector<1x16x256xbf16>
      %115 = vector.shape_cast %114 : vector<1x16x256xbf16> to vector<16x256xbf16>
      %116 = vector.shape_cast %113 : vector<16x256xbf16> to vector<1x16x256xbf16>
      tpu.vector_store %arg11[%c0_66, %c0_67, %c0_68], %116 {strides = array<i32>} : memref<1x16x256xbf16, #tpu.memory_space<vmem>>, vector<1x16x256xbf16>,
    } else {
    }
    return
  }
  func.func @transform_0(%arg0: i32, %arg1: i32, %arg2: i32) -> (i32, i32, i32) {
    %c0_i32 = arith.constant 0 : i32
    return %arg0, %arg1, %arg2 : i32, i32, i32
  }
  func.func @transform_1(%arg0: i32, %arg1: i32, %arg2: i32) -> (i32, i32) {
    %c0_i32 = arith.constant 0 : i32
    %c0_i32_0 = arith.constant 0 : i32
    return %arg2, %c0_i32 : i32, i32
  }
  func.func @transform_2(%arg0: i32, %arg1: i32, %arg2: i32) -> (i32, i32) {
    %c0_i32 = arith.constant 0 : i32
    %c0_i32_0 = arith.constant 0 : i32
    return %arg2, %c0_i32 : i32, i32
  }
  func.func @transform_3(%arg0: i32, %arg1: i32, %arg2: i32) -> (i32, i32) {
    %c0_i32 = arith.constant 0 : i32
    %c0_i32_0 = arith.constant 0 : i32
    return %arg2, %c0_i32 : i32, i32
  }
  func.func @transform_4(%arg0: i32, %arg1: i32, %arg2: i32) -> (i32, i32) {
    %c0_i32 = arith.constant 0 : i32
    %c0_i32_0 = arith.constant 0 : i32
    return %arg1, %c0_i32 : i32, i32
  }
  func.func @transform_5(%arg0: i32, %arg1: i32, %arg2: i32) -> (i32, i32) {
    %c0_i32 = arith.constant 0 : i32
    %c0_i32_0 = arith.constant 0 : i32
    return %arg1, %c0_i32 : i32, i32
  }
  func.func @transform_6(%arg0: i32, %arg1: i32, %arg2: i32) -> (i32, i32, i32) {
    %c0_i32 = arith.constant 0 : i32
    %c0_i32_0 = arith.constant 0 : i32
    return %arg0, %arg1, %c0_i32 : i32, i32, i32
  }
  func.func @transform_7(%arg0: i32, %arg1: i32, %arg2: i32) -> (i32, i32, i32) {
    %c0_i32 = arith.constant 0 : i32
    %c0_i32_0 = arith.constant 0 : i32
    return %arg0, %arg1, %c0_i32 : i32, i32, i32
  }
  func.func @transform_8(%arg0: i32, %arg1: i32, %arg2: i32) -> (i32, i32, i32) {
    %c0_i32 = arith.constant 0 : i32
    %c0_i32_0 = arith.constant 0 : i32
    return %arg0, %arg1, %c0_i32 : i32, i32, i32
  }
}

</mosaic_0001>

<llo_original>
// kernel: tpu_custom_call.1
$region0: #{tpu_custom_call.1}
  #allocation0 [shape = 'u32[]', space=smem, size = 0x4, offset = 0x4, fixed_abs, tag = 'smem constant byte address 0x4 - core index']
  #allocation1 [shape = 'u32[72,128]{1,0:T(1,128)}', space=vmem, size = 0x9000, scoped, tag = 'internal scratch']
  #allocation2 [shape = 'f32[16,512]{1,0:T(8,128)}', space=vmem, size = 0x8000, scoped, tag = 'scratch operand']
  #allocation3 [shape = 'f32[16,256]{1,0:T(8,128)}', space=vmem, size = 0x4000, scoped, tag = 'scratch operand']
  #allocation4 [shape = 'f32[16,256]{1,0:T(8,128)}', space=vmem, size = 0x4000, scoped, tag = 'scratch operand']
  %s0 = inlined_call_operand.hbm [shape: bf16[2,16,512], index: 0, kind: input, shape index: {}]
  %s1 = inlined_call_operand.hbm [shape: bf16[512,512], index: 1, kind: input, shape index: {}]
  %s2 = inlined_call_operand.hbm [shape: bf16[512,256], index: 2, kind: input, shape index: {}]
  %s3 = inlined_call_operand.hbm [shape: bf16[512,256], index: 3, kind: input, shape index: {}]
  %s4 = inlined_call_operand.hbm [shape: f32[16,128], index: 4, kind: input, shape index: {}]
  %s5 = inlined_call_operand.hbm [shape: f32[16,128], index: 5, kind: input, shape index: {}]
  %s6 = inlined_call_operand.hbm [shape: bf16[2,16,512], index: 6, kind: output, shape index: {0}]
  %s7 = inlined_call_operand.hbm [shape: bf16[2,16,256], index: 7, kind: output, shape index: {1}]
  %s8 = inlined_call_operand.hbm [shape: bf16[2,16,256], index: 8, kind: output, shape index: {2}]
  %9 = xla_tuple %s6, %s7, %s8
  %s10 = sld [smem:[#allocation0]]
  $region105: #{tpu_custom_call.1} parent=0
    _
  %s12 = ssub.s32 1, %s10
  %s13 = scalar_select 0, %s12, %s10
  $region1: #{tpu_custom_call.1} parent=0
    #allocation5 [shape = 'u8[32768]{0}', space=vmem, size = 0x8000, scoped, tag = 'input window, operand 0']
    #allocation6 [shape = 's32[2]{0}', space=sflag, size = 0x8, scoped, tag = 'scoped memory for tpu_custom_call.1']
    #allocation7 [shape = 's32[2]{0}', space=sflag, size = 0x8, scoped, tag = 'scoped memory for tpu_custom_call.1']
    #allocation8 [shape = 'u8[524288]{0}', space=vmem, size = 0x80000, scoped, tag = 'input window, operand 1, single buffered']
    #allocation9 [shape = 's32[1]{0}', space=sflag, size = 0x4, scoped, tag = 'scoped memory for tpu_custom_call.1']
    #allocation10 [shape = 'u8[262144]{0}', space=vmem, size = 0x40000, scoped, tag = 'input window, operand 2, single buffered']
    #allocation11 [shape = 'u8[262144]{0}', space=vmem, size = 0x40000, scoped, tag = 'input window, operand 3, single buffered']
    #allocation12 [shape = 's32[1]{0}', space=sflag, size = 0x4, scoped, tag = 'scoped memory for tpu_custom_call.1']
    #allocation13 [shape = 'u8[8192]{0}', space=vmem, size = 0x2000, scoped, tag = 'input window, operand 4, single buffered']
    #allocation14 [shape = 'u8[8192]{0}', space=vmem, size = 0x2000, scoped, tag = 'input window, operand 5, single buffered']
    #allocation15 [shape = 's32[1]{0}', space=sflag, size = 0x4, scoped, tag = 'scoped memory for tpu_custom_call.1']
    #allocation16 [shape = 'u8[32768]{0}', space=vmem, size = 0x8000, scoped, tag = 'output window, operand 0']
    #allocation17 [shape = 'u8[16384]{0}', space=vmem, size = 0x4000, scoped, tag = 'output window, operand 1']
    #allocation18 [shape = 's32[2]{0}', space=sflag, size = 0x8, scoped, tag = 'scoped memory for tpu_custom_call.1']
    #allocation19 [shape = 'u8[16384]{0}', space=vmem, size = 0x4000, scoped, tag = 'output window, operand 2']
    %14 = vsyncpa [#allocation6], 0
    %s15 = scalar_lea.sflag [#allocation6], 1
    %16 = vsyncpa %s15, 0
    %17 = vsyncpa [#allocation9], 0
    %18 = vsyncpa [#allocation12], 0
    %19 = vsyncpa [#allocation15], 0
    %20 = vsyncpa [#allocation7], 0
    %s21 = scalar_lea.sflag [#allocation7], 1
    %22 = vsyncpa %s21, 0
    %23 = vsyncpa [#allocation18], 0
    %s24 = scalar_lea.sflag [#allocation18], 1
    %25 = vsyncpa %s24, 0
    loop: start=0, step=1, limit=4
    $region2: #{tpu_custom_call.1} parent=1 // loop_pre_header
      _
    $region3: #{tpu_custom_call.1} parent=1 // loop_header
      %s27 = sphi 0, %s31
      %p28 = scmp.ge.s32.totalorder %s27, 4
      %s34 = sphi 0, %s53
      %s35 = sphi 0, %s49
      %s36 = sphi 0, %s45
      %s37 = sphi 0, %s34
      %s38 = sphi 0, %s35
      %s39 = sphi 0, %s36
      %s40 = sphi 0, %s37
      %s41 = sphi 0, %s38
      %s42 = sphi 0, %s39
      %s60 = sphi 0, %s62
      %s63 = sphi 0, %s60
      %s64 = sphi 0, %s63
      %s80 = sphi 0, %s64
      %s86 = sphi 0, %s88
      %s89 = sphi 0, %s86
      %s90 = sphi 0, %s89
      %s106 = sphi 0, %s90
      %s112 = sphi 0, %s114
      %s115 = sphi 0, %s112
      %s116 = sphi 0, %s115
      %s132 = sphi 0, %s116
      %s138 = sphi 0, %s140
      %s141 = sphi 0, %s138
      %s142 = sphi 0, %s141
      %s158 = sphi 0, %s142
      %s164 = sphi 0, %s166
      %s167 = sphi 0, %s164
      %s168 = sphi 0, %s167
      %s184 = sphi 0, %s168
      %s190 = sphi 0, %s192
      %s193 = sphi 0, %s190
      %s194 = sphi 0, %s193
      %s210 = sphi 0, %s194
      %s218 = sphi 0, %s220
      %s221 = sphi 0, %s218
      %s222 = sphi 0, %s221
      %s238 = sphi 0, %s222
      %s246 = sphi 0, %s248
      %s249 = sphi 0, %s246
      %s250 = sphi 0, %s249
      %s266 = sphi 0, %s250
      %s274 = sphi 0, %s276
      %s277 = sphi 0, %s274
      %s278 = sphi 0, %s277
      %s294 = sphi 0, %s278
    $region4: #{tpu_custom_call.1} parent=1 // loop_header_branch
      %30 = sbr.rel (%p28) target = $region8
    $region5: #{tpu_custom_call.1} parent=1 // loop_body
      %s32 = ssub.s32 %s27, 1
      %s33 = ssub.s32 %s27, 2
      %s43 = sadd.s32 1, %s36
      %p44 = scmp.ge.s32.totalorder %s43, 1
      %s45 = scalar_select %p44, 0, %s43
      %s46 = sadd.s32 1, %s35
      %s47 = scalar_select %p44, %s46, %s35
      %p48 = scmp.ge.s32.totalorder %s47, 1
      %s49 = scalar_select %p48, 0, %s47
      %s50 = sadd.s32 1, %s34
      %s51 = scalar_select %p48, %s50, %s34
      %p52 = scmp.ge.s32.totalorder %s51, 2
      %s53 = scalar_select %p52, 0, %s51
      %s54 = ssub.s32 %s34, %s53
      %s55 = ssub.s32 %s35, %s49
      %s56 = sor.u32 %s54, %s55
      %s57 = ssub.s32 %s36, %s45
      %s58 = sor.u32 %s56, %s57
      %p59 = scmp.eq.s32.totalorder %s58, 0
      %s61 = sadd.s32 %s60, 1
      %s62 = scalar_select %p59, %s60, %s61
      %p65 = pneg %p59
      %p66 = scmp.eq.s32.totalorder %s27, 1
      %p67 = por %p65, %p66
      %p68 = scmp.ne.s32.totalorder %s60, %s63
      %p69 = scmp.eq.s32.totalorder %s27, 0
      %p70 = por %p68, %p69
      %p71 = scmp.ne.s32.totalorder %s60, %s63
      %p72 = scmp.eq.s32.totalorder %s32, 1
      %p73 = por %p71, %p72
      %p74 = scmp.ne.s32.totalorder %s63, %s64
      %p75 = scmp.eq.s32.totalorder %s32, 0
      %p76 = por %p74, %p75
      %p77 = scmp.ne.s32.totalorder %s63, %s64
      %p78 = scmp.eq.s32.totalorder %s33, 1
      %p79 = por %p77, %p78
      %p81 = scmp.ne.s32.totalorder %s64, %s80
      %p82 = scmp.eq.s32.totalorder %s33, 0
      %p83 = por %p81, %p82
      %s84 = ssub.s32 %s36, %s45
      %p85 = scmp.eq.s32.totalorder %s84, 0
      %s87 = sadd.s32 %s86, 1
      %s88 = scalar_select %p85, %s86, %s87
      %p91 = pneg %p85
      %p92 = scmp.eq.s32.totalorder %s27, 1
      %p93 = por %p91, %p92
      %p94 = scmp.ne.s32.totalorder %s86, %s89
      %p95 = scmp.eq.s32.totalorder %s27, 0
      %p96 = por %p94, %p95
      %p97 = scmp.ne.s32.totalorder %s86, %s89
      %p98 = scmp.eq.s32.totalorder %s32, 1
      %p99 = por %p97, %p98
      %p100 = scmp.ne.s32.totalorder %s89, %s90
      %p101 = scmp.eq.s32.totalorder %s32, 0
      %p102 = por %p100, %p101
      %p103 = scmp.ne.s32.totalorder %s89, %s90
      %p104 = scmp.eq.s32.totalorder %s33, 1
      %p105 = por %p103, %p104
      %p107 = scmp.ne.s32.totalorder %s90, %s106
      %p108 = scmp.eq.s32.totalorder %s33, 0
      %p109 = por %p107, %p108
      %s110 = ssub.s32 %s36, %s45
      %p111 = scmp.eq.s32.totalorder %s110, 0
      %s113 = sadd.s32 %s112, 1
      %s114 = scalar_select %p111, %s112, %s113
      %p117 = pneg %p111
      %p118 = scmp.eq.s32.totalorder %s27, 1
      %p119 = por %p117, %p118
      %p120 = scmp.ne.s32.totalorder %s112, %s115
      %p121 = scmp.eq.s32.totalorder %s27, 0
      %p122 = por %p120, %p121
      %p123 = scmp.ne.s32.totalorder %s112, %s115
      %p124 = scmp.eq.s32.totalorder %s32, 1
      %p125 = por %p123, %p124
      %p126 = scmp.ne.s32.totalorder %s115, %s116
      %p127 = scmp.eq.s32.totalorder %s32, 0
      %p128 = por %p126, %p127
      %p129 = scmp.ne.s32.totalorder %s115, %s116
      %p130 = scmp.eq.s32.totalorder %s33, 1
      %p131 = por %p129, %p130
      %p133 = scmp.ne.s32.totalorder %s116, %s132
      %p134 = scmp.eq.s32.totalorder %s33, 0
      %p135 = por %p133, %p134
      %s136 = ssub.s32 %s36, %s45
      %p137 = scmp.eq.s32.totalorder %s136, 0
      %s139 = sadd.s32 %s138, 1
      %s140 = scalar_select %p137, %s138, %s139
      %p143 = pneg %p137
      %p144 = scmp.eq.s32.totalorder %s27, 1
      %p145 = por %p143, %p144
      %p146 = scmp.ne.s32.totalorder %s138, %s141
      %p147 = scmp.eq.s32.totalorder %s27, 0
      %p148 = por %p146, %p147
      %p149 = scmp.ne.s32.totalorder %s138, %s141
      %p150 = scmp.eq.s32.totalorder %s32, 1
      %p151 = por %p149, %p150
      %p152 = scmp.ne.s32.totalorder %s141, %s142
      %p153 = scmp.eq.s32.totalorder %s32, 0
      %p154 = por %p152, %p153
      %p155 = scmp.ne.s32.totalorder %s141, %s142
      %p156 = scmp.eq.s32.totalorder %s33, 1
      %p157 = por %p155, %p156
      %p159 = scmp.ne.s32.totalorder %s142, %s158
      %p160 = scmp.eq.s32.totalorder %s33, 0
      %p161 = por %p159, %p160
      %s162 = ssub.s32 %s35, %s49
      %p163 = scmp.eq.s32.totalorder %s162, 0
      %s165 = sadd.s32 %s164, 1
      %s166 = scalar_select %p163, %s164, %s165
      %p169 = pneg %p163
      %p170 = scmp.eq.s32.totalorder %s27, 1
      %p171 = por %p169, %p170
      %p172 = scmp.ne.s32.totalorder %s164, %s167
      %p173 = scmp.eq.s32.totalorder %s27, 0
      %p174 = por %p172, %p173
      %p175 = scmp.ne.s32.totalorder %s164, %s167
      %p176 = scmp.eq.s32.totalorder %s32, 1
      %p177 = por %p175, %p176
      %p178 = scmp.ne.s32.totalorder %s167, %s168
      %p179 = scmp.eq.s32.totalorder %s32, 0
      %p180 = por %p178, %p179
      %p181 = scmp.ne.s32.totalorder %s167, %s168
      %p182 = scmp.eq.s32.totalorder %s33, 1
      %p183 = por %p181, %p182
      %p185 = scmp.ne.s32.totalorder %s168, %s184
      %p186 = scmp.eq.s32.totalorder %s33, 0
      %p187 = por %p185, %p186
      %s188 = ssub.s32 %s35, %s49
      %p189 = scmp.eq.s32.totalorder %s188, 0
      %s191 = sadd.s32 %s190, 1
      %s192 = scalar_select %p189, %s190, %s191
      %p195 = pneg %p189
      %p196 = scmp.eq.s32.totalorder %s27, 1
      %p197 = por %p195, %p196
      %p198 = scmp.ne.s32.totalorder %s190, %s193
      %p199 = scmp.eq.s32.totalorder %s27, 0
      %p200 = por %p198, %p199
      %p201 = scmp.ne.s32.totalorder %s190, %s193
      %p202 = scmp.eq.s32.totalorder %s32, 1
      %p203 = por %p201, %p202
      %p204 = scmp.ne.s32.totalorder %s193, %s194
      %p205 = scmp.eq.s32.totalorder %s32, 0
      %p206 = por %p204, %p205
      %p207 = scmp.ne.s32.totalorder %s193, %s194
      %p208 = scmp.eq.s32.totalorder %s33, 1
      %p209 = por %p207, %p208
      %p211 = scmp.ne.s32.totalorder %s194, %s210
      %p212 = scmp.eq.s32.totalorder %s33, 0
      %p213 = por %p211, %p212
      %s214 = ssub.s32 %s34, %s53
      %s215 = ssub.s32 %s35, %s49
      %s216 = sor.u32 %s214, %s215
      %p217 = scmp.eq.s32.totalorder %s216, 0
      %s219 = sadd.s32 %s218, 1
      %s220 = scalar_select %p217, %s218, %s219
      %p223 = pneg %p217
      %p224 = scmp.eq.s32.totalorder %s27, 1
      %p225 = por %p223, %p224
      %p226 = scmp.ne.s32.totalorder %s218, %s221
      %p227 = scmp.eq.s32.totalorder %s27, 0
      %p228 = por %p226, %p227
      %p229 = scmp.ne.s32.totalorder %s218, %s221
      %p230 = scmp.eq.s32.totalorder %s32, 1
      %p231 = por %p229, %p230
      %p232 = scmp.ne.s32.totalorder %s221, %s222
      %p233 = scmp.eq.s32.totalorder %s32, 0
      %p234 = por %p232, %p233
      %p235 = scmp.ne.s32.totalorder %s221, %s222
      %p236 = scmp.eq.s32.totalorder %s33, 1
      %p237 = por %p235, %p236
      %p239 = scmp.ne.s32.totalorder %s222, %s238
      %p240 = scmp.eq.s32.totalorder %s33, 0
      %p241 = por %p239, %p240
      %s242 = ssub.s32 %s34, %s53
      %s243 = ssub.s32 %s35, %s49
      %s244 = sor.u32 %s242, %s243
      %p245 = scmp.eq.s32.totalorder %s244, 0
      %s247 = sadd.s32 %s246, 1
      %s248 = scalar_select %p245, %s246, %s247
      %p251 = pneg %p245
      %p252 = scmp.eq.s32.totalorder %s27, 1
      %p253 = por %p251, %p252
      %p254 = scmp.ne.s32.totalorder %s246, %s249
      %p255 = scmp.eq.s32.totalorder %s27, 0
      %p256 = por %p254, %p255
      %p257 = scmp.ne.s32.totalorder %s246, %s249
      %p258 = scmp.eq.s32.totalorder %s32, 1
      %p259 = por %p257, %p258
      %p260 = scmp.ne.s32.totalorder %s249, %s250
      %p261 = scmp.eq.s32.totalorder %s32, 0
      %p262 = por %p260, %p261
      %p263 = scmp.ne.s32.totalorder %s249, %s250
      %p264 = scmp.eq.s32.totalorder %s33, 1
      %p265 = por %p263, %p264
      %p267 = scmp.ne.s32.totalorder %s250, %s266
      %p268 = scmp.eq.s32.totalorder %s33, 0
      %p269 = por %p267, %p268
      %s270 = ssub.s32 %s34, %s53
      %s271 = ssub.s32 %s35, %s49
      %s272 = sor.u32 %s270, %s271
      %p273 = scmp.eq.s32.totalorder %s272, 0
      %s275 = sadd.s32 %s274, 1
      %s276 = scalar_select %p273, %s274, %s275
      %p279 = pneg %p273
      %p280 = scmp.eq.s32.totalorder %s27, 1
      %p281 = por %p279, %p280
      %p282 = scmp.ne.s32.totalorder %s274, %s277
      %p283 = scmp.eq.s32.totalorder %s27, 0
      %p284 = por %p282, %p283
      %p285 = scmp.ne.s32.totalorder %s274, %s277
      %p286 = scmp.eq.s32.totalorder %s32, 1
      %p287 = por %p285, %p286
      %p288 = scmp.ne.s32.totalorder %s277, %s278
      %p289 = scmp.eq.s32.totalorder %s32, 0
      %p290 = por %p288, %p289
      %p291 = scmp.ne.s32.totalorder %s277, %s278
      %p292 = scmp.eq.s32.totalorder %s33, 1
      %p293 = por %p291, %p292
      %p295 = scmp.ne.s32.totalorder %s278, %s294
      %p296 = scmp.eq.s32.totalorder %s33, 0
      %p297 = por %p295, %p296
      %p298 = scmp.le.s32.totalorder 1, %s27
      %p299 = scmp.lt.s32.totalorder %s27, 3
      %p300 = pnand %p298, %p299
      %p301 = pneg %p300
      // Predicated region
      $region9: #{tpu_custom_call.1} parent=5 // pred_check
        _
      $region10: #{tpu_custom_call.1} parent=5 // pred_check_branch
        %303 = sbr.rel (%p300) target = $region12
      $region11: #{tpu_custom_call.1} parent=5 // pred_region
        %s304 = ssub.s32 %s27, 1
        // Predicated region
        $region13: #{tpu_custom_call.1} parent=11 // pred_check
          %p305 = pneg %p102
        $region14: #{tpu_custom_call.1} parent=11 // pred_check_branch
          %307 = sbr.rel (%p305) target = $region16
        $region15: #{tpu_custom_call.1} parent=11 // pred_region
          %s308 = smul.u32 64, %s39
          %310 = vsyncadd [#allocation9], 0
          %s311 = smul.addr %s308, 4
          %s312 = smul.addr %s311, 4
          %s313 = scalar_lea.hbm %s1, %s312
          %s314 = sshll.u32 %s313, 4
          %s315 = int_to_ptr.hbm [resolvable:$true] %s314
          %s316 = sshll.u32 [#allocation8], 4
          %s317 = int_to_ptr.vmem [resolvable:$true] %s316
          %322 = dma.hbm_to_vmem [thread:$0]  %s315, 16384, %s317, [#allocation9], 256, 256, 16
        $region16: #{tpu_custom_call.1} parent=11 // pred_fallthru
          _
        // Predicated region
        $region17: #{tpu_custom_call.1} parent=11 // pred_check
          %p323 = pneg %p128
        $region18: #{tpu_custom_call.1} parent=11 // pred_check_branch
          %325 = sbr.rel (%p323) target = $region20
        $region19: #{tpu_custom_call.1} parent=11 // pred_region
          %s326 = smul.u32 64, %s39
          %328 = vsyncadd [#allocation9], 0
          %s329 = smul.addr %s326, 2
          %s330 = smul.addr %s329, 4
          %s331 = scalar_lea.hbm %s2, %s330
          %s332 = sshll.u32 %s331, 4
          %s333 = int_to_ptr.hbm [resolvable:$true] %s332
          %s334 = sshll.u32 [#allocation10], 4
          %s335 = int_to_ptr.vmem [resolvable:$true] %s334
          %340 = dma.hbm_to_vmem [thread:$0]  %s333, 8192, %s335, [#allocation9], 128, 128, 8
        $region20: #{tpu_custom_call.1} parent=11 // pred_fallthru
          _
        // Predicated region
        $region21: #{tpu_custom_call.1} parent=11 // pred_check
          %p341 = pneg %p154
        $region22: #{tpu_custom_call.1} parent=11 // pred_check_branch
          %343 = sbr.rel (%p341) target = $region24
        $region23: #{tpu_custom_call.1} parent=11 // pred_region
          %s344 = smul.u32 64, %s39
          %346 = vsyncadd [#allocation12], 0
          %s347 = smul.addr %s344, 2
          %s348 = smul.addr %s347, 4
          %s349 = scalar_lea.hbm %s3, %s348
          %s350 = sshll.u32 %s349, 4
          %s351 = int_to_ptr.hbm [resolvable:$true] %s350
          %s352 = sshll.u32 [#allocation11], 4
          %s353 = int_to_ptr.vmem [resolvable:$true] %s352
          %358 = dma.hbm_to_vmem [thread:$0]  %s351, 8192, %s353, [#allocation12], 128, 128, 8
        $region24: #{tpu_custom_call.1} parent=11 // pred_fallthru
          _
        // Predicated region
        $region25: #{tpu_custom_call.1} parent=11 // pred_check
          %p359 = pneg %p180
        $region26: #{tpu_custom_call.1} parent=11 // pred_check_branch
          %361 = sbr.rel (%p359) target = $region28
        $region27: #{tpu_custom_call.1} parent=11 // pred_region
          %s362 = smul.u32 2, %s38
          %364 = vsyncadd [#allocation12], 0
          %s365 = smul.addr %s362, 8
          %s366 = scalar_lea.hbm %s4, %s365
          %s367 = sshll.u32 %s366, 4
          %s368 = int_to_ptr.hbm [resolvable:$true] %s367
          %s369 = sshll.u32 [#allocation13], 4
          %s370 = int_to_ptr.vmem [resolvable:$true] %s369
          %375 = dma.hbm_to_vmem [thread:$0]  %s368, 256, %s370, [#allocation12], 128, 128, 8
        $region28: #{tpu_custom_call.1} parent=11 // pred_fallthru
          _
        // Predicated region
        $region29: #{tpu_custom_call.1} parent=11 // pred_check
          %p376 = pneg %p206
        $region30: #{tpu_custom_call.1} parent=11 // pred_check_branch
          %378 = sbr.rel (%p376) target = $region32
        $region31: #{tpu_custom_call.1} parent=11 // pred_region
          %s379 = smul.u32 2, %s38
          %381 = vsyncadd [#allocation15], 0
          %s382 = smul.addr %s379, 8
          %s383 = scalar_lea.hbm %s5, %s382
          %s384 = sshll.u32 %s383, 4
          %s385 = int_to_ptr.hbm [resolvable:$true] %s384
          %s386 = sshll.u32 [#allocation14], 4
          %s387 = int_to_ptr.vmem [resolvable:$true] %s386
          %392 = dma.hbm_to_vmem [thread:$0]  %s385, 256, %s387, [#allocation15], 128, 128, 8
        $region32: #{tpu_custom_call.1} parent=11 // pred_fallthru
          _
      $region12: #{tpu_custom_call.1} parent=5 // pred_fallthru
        _
      %p393 = scmp.lt.s32.totalorder %s27, 2
      // Predicated region
      $region33: #{tpu_custom_call.1} parent=5 // pred_check
        %p394 = pneg %p393
      $region34: #{tpu_custom_call.1} parent=5 // pred_check_branch
        %396 = sbr.rel (%p394) target = $region36
      $region35: #{tpu_custom_call.1} parent=5 // pred_region
        // Predicated region
        $region37: #{tpu_custom_call.1} parent=35 // pred_check
          %p397 = pneg %p70
        $region38: #{tpu_custom_call.1} parent=35 // pred_check_branch
          %399 = sbr.rel (%p397) target = $region40
        $region39: #{tpu_custom_call.1} parent=35 // pred_region
          %s400 = sand.u32 %s60, 1
          %s401 = scalar_lea.sflag [#allocation6], %s400
          %s402 = sand.u32 %s60, 1
          %s403 = smul.addr %s402, 32
          %s404 = scalar_lea.vmem [#allocation5], %s403
          %s405 = smul.u32 2, %s35
          %s406 = smul.u32 4, %s36
          %408 = vsyncadd %s401, 0
          %s409 = smul.addr %s405, 4
          %s410 = sadd.s32 %s406, %s409
          %s411 = smul.addr %s34, 8
          %s412 = sadd.s32 %s410, %s411
          %s413 = smul.addr %s412, 4
          %s414 = scalar_lea.hbm %s0, %s413
          %s415 = sshll.u32 %s414, 4
          %s416 = int_to_ptr.hbm [resolvable:$true] %s415
          %s417 = sshll.u32 %s404, 4
          %s418 = int_to_ptr.vmem [resolvable:$true] %s417
          %423 = dma.hbm_to_vmem [thread:$0]  %s416, 512, %s418, %s401, 256, 256, 16
        $region40: #{tpu_custom_call.1} parent=35 // pred_fallthru
          _
      $region36: #{tpu_custom_call.1} parent=5 // pred_fallthru
        _
      %p424 = scmp.le.s32.totalorder 1, %s27
      %p425 = scmp.lt.s32.totalorder %s27, 3
      %p426 = pnand %p424, %p425
      %p427 = pneg %p426
      // Predicated region
      $region41: #{tpu_custom_call.1} parent=5 // pred_check
        _
      $region42: #{tpu_custom_call.1} parent=5 // pred_check_branch
        %429 = sbr.rel (%p426) target = $region44
      $region43: #{tpu_custom_call.1} parent=5 // pred_region
        %s430 = ssub.s32 %s27, 1
        %s431 = sand.u32 %s63, 1
        %s432 = scalar_lea.sflag [#allocation6], %s431
        %s433 = sand.u32 %s63, 1
        %s434 = smul.addr %s433, 32
        %s435 = scalar_lea.vmem [#allocation5], %s434
        // Predicated region
        $region45: #{tpu_custom_call.1} parent=43 // pred_check
          %p436 = pneg %p76
        $region46: #{tpu_custom_call.1} parent=43 // pred_check_branch
          %438 = sbr.rel (%p436) target = $region48
        $region47: #{tpu_custom_call.1} parent=43 // pred_region
          %440 = dma.done %s432, 512
        $region48: #{tpu_custom_call.1} parent=43 // pred_fallthru
          _
        // Predicated region
        $region49: #{tpu_custom_call.1} parent=43 // pred_check
          %p441 = pneg %p102
        $region50: #{tpu_custom_call.1} parent=43 // pred_check_branch
          %443 = sbr.rel (%p441) target = $region52
        $region51: #{tpu_custom_call.1} parent=43 // pred_region
          %445 = dma.done [#allocation9], 16384
        $region52: #{tpu_custom_call.1} parent=43 // pred_fallthru
          _
        // Predicated region
        $region53: #{tpu_custom_call.1} parent=43 // pred_check
          %p446 = pneg %p128
        $region54: #{tpu_custom_call.1} parent=43 // pred_check_branch
          %448 = sbr.rel (%p446) target = $region56
        $region55: #{tpu_custom_call.1} parent=43 // pred_region
          %450 = dma.done [#allocation9], 8192
        $region56: #{tpu_custom_call.1} parent=43 // pred_fallthru
          _
        // Predicated region
        $region57: #{tpu_custom_call.1} parent=43 // pred_check
          %p451 = pneg %p154
        $region58: #{tpu_custom_call.1} parent=43 // pred_check_branch
          %453 = sbr.rel (%p451) target = $region60
        $region59: #{tpu_custom_call.1} parent=43 // pred_region
          %455 = dma.done [#allocation12], 8192
        $region60: #{tpu_custom_call.1} parent=43 // pred_fallthru
          _
        // Predicated region
        $region61: #{tpu_custom_call.1} parent=43 // pred_check
          %p456 = pneg %p180
        $region62: #{tpu_custom_call.1} parent=43 // pred_check_branch
          %458 = sbr.rel (%p456) target = $region64
        $region63: #{tpu_custom_call.1} parent=43 // pred_region
          %460 = dma.done [#allocation12], 256
        $region64: #{tpu_custom_call.1} parent=43 // pred_fallthru
          _
        // Predicated region
        $region65: #{tpu_custom_call.1} parent=43 // pred_check
          %p461 = pneg %p206
        $region66: #{tpu_custom_call.1} parent=43 // pred_check_branch
          %463 = sbr.rel (%p461) target = $region68
        $region67: #{tpu_custom_call.1} parent=43 // pred_region
          %465 = dma.done [#allocation15], 256
        $region68: #{tpu_custom_call.1} parent=43 // pred_fallthru
          _
        %s466 = sand.u32 %s63, 1
        %s467 = scalar_lea.sflag [#allocation6], %s466
        %s468 = sand.u32 %s63, 1
        %s469 = smul.addr %s468, 32
        %s470 = scalar_lea.vmem [#allocation5], %s469
        %p471 = pneg %p76
        %p472 = pneg %p73
        %p473 = pneg %p102
        %p474 = pneg %p99
        %p475 = pneg %p128
        %p476 = pneg %p125
        %p477 = pneg %p154
        %p478 = pneg %p151
        %p479 = pneg %p180
        %p480 = pneg %p177
        %p481 = pneg %p206
        %p482 = pneg %p203
        %p483 = pneg %p234
        %p484 = pneg %p231
        %s485 = sand.u32 %s221, 1
        %s486 = scalar_lea.sflag [#allocation7], %s485
        %s487 = sand.u32 %s221, 1
        %s488 = smul.addr %s487, 32
        %s489 = scalar_lea.vmem [#allocation16], %s488
        %p490 = pneg %p262
        %p491 = pneg %p259
        %s492 = sand.u32 %s32, 1
        %s493 = scalar_lea.sflag [#allocation18], %s492
        %s494 = sand.u32 %s249, 1
        %s495 = smul.addr %s494, 16
        %s496 = scalar_lea.vmem [#allocation17], %s495
        %p497 = pneg %p290
        %p498 = pneg %p287
        %s499 = sand.u32 %s32, 1
        %s500 = scalar_lea.sflag [#allocation18], %s499
        %s501 = sand.u32 %s277, 1
        %s502 = smul.addr %s501, 16
        %s503 = scalar_lea.vmem [#allocation19], %s502
        %s504 = smul.u32 2, %s38
        %s505 = smul.u32 4, %s39
        %s506 = smul.u32 64, %s39
        %s507 = smul.u32 64, %s39
        %s508 = smul.u32 64, %s39
        %s509 = smul.u32 2, %s38
        %s510 = smul.u32 2, %s38
        %s511 = smul.u32 2, %s38
        %s512 = smul.u32 2, %s38
        %s513 = smul.u32 2, %s38
        %p514 = scmp.eq.s32.totalorder %s39, 0
        // Predicated region
        $region69: #{tpu_custom_call.1} parent=43 // pred_check
          %p515 = pneg %p514
        $region70: #{tpu_custom_call.1} parent=43 // pred_check_branch
          %517 = sbr.rel (%p515) target = $region72
        $region71: #{tpu_custom_call.1} parent=43 // pred_region
          %518 = vst [vmem:[#allocation2] sm:$0xff] 0.0
          %519 = vst [vmem:[#allocation2 + $0x8] sm:$0xff] 0.0
          %520 = vst [vmem:[#allocation2 + $0x10] sm:$0xff] 0.0
          %521 = vst [vmem:[#allocation2 + $0x18] sm:$0xff] 0.0
          %522 = vst [vmem:[#allocation2 + $0x20] sm:$0xff] 0.0
          %523 = vst [vmem:[#allocation2 + $0x28] sm:$0xff] 0.0
          %524 = vst [vmem:[#allocation2 + $0x30] sm:$0xff] 0.0
          %525 = vst [vmem:[#allocation2 + $0x38] sm:$0xff] 0.0
          %526 = vst [vmem:[#allocation3] sm:$0xff] 0.0
          %527 = vst [vmem:[#allocation3 + $0x8] sm:$0xff] 0.0
          %528 = vst [vmem:[#allocation3 + $0x10] sm:$0xff] 0.0
          %529 = vst [vmem:[#allocation3 + $0x18] sm:$0xff] 0.0
          %530 = vst [vmem:[#allocation4] sm:$0xff] 0.0
          %531 = vst [vmem:[#allocation4 + $0x8] sm:$0xff] 0.0
          %532 = vst [vmem:[#allocation4 + $0x10] sm:$0xff] 0.0
          %533 = vst [vmem:[#allocation4 + $0x18] sm:$0xff] 0.0
        $region72: #{tpu_custom_call.1} parent=43 // pred_fallthru
          _
        %v534 = vld [vmem:[%s435] sm:$0xff]
        %v535 = vld [vmem:[%s435 + $0x8] sm:$0xff]
        %v536 = vld [vmem:[%s435 + $0x10] sm:$0xff]
        %v537 = vld [vmem:[%s435 + $0x18] sm:$0xff]
        %v538 = vld [vmem:[#allocation2] sm:$0xff]
        %v539 = vld [vmem:[#allocation2 + $0x8] sm:$0xff]
        %v540 = vld [vmem:[#allocation2 + $0x10] sm:$0xff]
        %v541 = vld [vmem:[#allocation2 + $0x18] sm:$0xff]
        %v542 = vld [vmem:[#allocation2 + $0x20] sm:$0xff]
        %v543 = vld [vmem:[#allocation2 + $0x28] sm:$0xff]
        %v544 = vld [vmem:[#allocation2 + $0x30] sm:$0xff]
        %v545 = vld [vmem:[#allocation2 + $0x38] sm:$0xff]
        %v546 = vld [vmem:[#allocation8] sm:$0xff]
        %v547 = vld [vmem:[#allocation8 + $0x8] sm:$0xff]
        %v548 = vld [vmem:[#allocation8 + $0x10] sm:$0xff]
        %v549 = vld [vmem:[#allocation8 + $0x18] sm:$0xff]
        %v550 = vld [vmem:[#allocation8 + $0x20] sm:$0xff]
        %v551 = vld [vmem:[#allocation8 + $0x28] sm:$0xff]
        %v552 = vld [vmem:[#allocation8 + $0x30] sm:$0xff]
        %v553 = vld [vmem:[#allocation8 + $0x38] sm:$0xff]
        %v554 = vld [vmem:[#allocation8 + $0x40] sm:$0xff]
        %v555 = vld [vmem:[#allocation8 + $0x48] sm:$0xff]
        %v556 = vld [vmem:[#allocation8 + $0x50] sm:$0xff]
        %v557 = vld [vmem:[#allocation8 + $0x58] sm:$0xff]
        %v558 = vld [vmem:[#allocation8 + $0x60] sm:$0xff]
        %v559 = vld [vmem:[#allocation8 + $0x68] sm:$0xff]
        %v560 = vld [vmem:[#allocation8 + $0x70] sm:$0xff]
        %v561 = vld [vmem:[#allocation8 + $0x78] sm:$0xff]
        %v562 = vld [vmem:[#allocation8 + $0x80] sm:$0xff]
        %v563 = vld [vmem:[#allocation8 + $0x88] sm:$0xff]
        %v564 = vld [vmem:[#allocation8 + $0x90] sm:$0xff]
        %v565 = vld [vmem:[#allocation8 + $0x98] sm:$0xff]
        %v566 = vld [vmem:[#allocation8 + $0xa0] sm:$0xff]
        %v567 = vld [vmem:[#allocation8 + $0xa8] sm:$0xff]
        %v568 = vld [vmem:[#allocation8 + $0xb0] sm:$0xff]
        %v569 = vld [vmem:[#allocation8 + $0xb8] sm:$0xff]
        %v570 = vld [vmem:[#allocation8 + $0xc0] sm:$0xff]
        %v571 = vld [vmem:[#allocation8 + $0xc8] sm:$0xff]
        %v572 = vld [vmem:[#allocation8 + $0xd0] sm:$0xff]
        %v573 = vld [vmem:[#allocation8 + $0xd8] sm:$0xff]
        %v574 = vld [vmem:[#allocation8 + $0xe0] sm:$0xff]
        %v575 = vld [vmem:[#allocation8 + $0xe8] sm:$0xff]
        %v576 = vld [vmem:[#allocation8 + $0xf0] sm:$0xff]
        %v577 = vld [vmem:[#allocation8 + $0xf8] sm:$0xff]
        %v578 = vld [vmem:[#allocation8 + $0x100] sm:$0xff]
        %v579 = vld [vmem:[#allocation8 + $0x108] sm:$0xff]
        %v580 = vld [vmem:[#allocation8 + $0x110] sm:$0xff]
        %v581 = vld [vmem:[#allocation8 + $0x118] sm:$0xff]
        %v582 = vld [vmem:[#allocation8 + $0x120] sm:$0xff]
        %v583 = vld [vmem:[#allocation8 + $0x128] sm:$0xff]
        %v584 = vld [vmem:[#allocation8 + $0x130] sm:$0xff]
        %v585 = vld [vmem:[#allocation8 + $0x138] sm:$0xff]
        %v586 = vld [vmem:[#allocation8 + $0x140] sm:$0xff]
        %v587 = vld [vmem:[#allocation8 + $0x148] sm:$0xff]
        %v588 = vld [vmem:[#allocation8 + $0x150] sm:$0xff]
        %v589 = vld [vmem:[#allocation8 + $0x158] sm:$0xff]
        %v590 = vld [vmem:[#allocation8 + $0x160] sm:$0xff]
        %v591 = vld [vmem:[#allocation8 + $0x168] sm:$0xff]
        %v592 = vld [vmem:[#allocation8 + $0x170] sm:$0xff]
        %v593 = vld [vmem:[#allocation8 + $0x178] sm:$0xff]
        %v594 = vld [vmem:[#allocation8 + $0x180] sm:$0xff]
        %v595 = vld [vmem:[#allocation8 + $0x188] sm:$0xff]
        %v596 = vld [vmem:[#allocation8 + $0x190] sm:$0xff]
        %v597 = vld [vmem:[#allocation8 + $0x198] sm:$0xff]
        %v598 = vld [vmem:[#allocation8 + $0x1a0] sm:$0xff]
        %v599 = vld [vmem:[#allocation8 + $0x1a8] sm:$0xff]
        %v600 = vld [vmem:[#allocation8 + $0x1b0] sm:$0xff]
        %v601 = vld [vmem:[#allocation8 + $0x1b8] sm:$0xff]
        %v602 = vld [vmem:[#allocation8 + $0x1c0] sm:$0xff]
        %v603 = vld [vmem:[#allocation8 + $0x1c8] sm:$0xff]
        %v604 = vld [vmem:[#allocation8 + $0x1d0] sm:$0xff]
        %v605 = vld [vmem:[#allocation8 + $0x1d8] sm:$0xff]
        %v606 = vld [vmem:[#allocation8 + $0x1e0] sm:$0xff]
        %v607 = vld [vmem:[#allocation8 + $0x1e8] sm:$0xff]
        %v608 = vld [vmem:[#allocation8 + $0x1f0] sm:$0xff]
        %v609 = vld [vmem:[#allocation8 + $0x1f8] sm:$0xff]
        %v610 = vld [vmem:[#allocation8 + $0x200] sm:$0xff]
        %v611 = vld [vmem:[#allocation8 + $0x208] sm:$0xff]
        %v612 = vld [vmem:[#allocation8 + $0x210] sm:$0xff]
        %v613 = vld [vmem:[#allocation8 + $0x218] sm:$0xff]
        %v614 = vld [vmem:[#allocation8 + $0x220] sm:$0xff]
        %v615 = vld [vmem:[#allocation8 + $0x228] sm:$0xff]
        %v616 = vld [vmem:[#allocation8 + $0x230] sm:$0xff]
        %v617 = vld [vmem:[#allocation8 + $0x238] sm:$0xff]
        %v618 = vld [vmem:[#allocation8 + $0x240] sm:$0xff]
        %v619 = vld [vmem:[#allocation8 + $0x248] sm:$0xff]
        %v620 = vld [vmem:[#allocation8 + $0x250] sm:$0xff]
        %v621 = vld [vmem:[#allocation8 + $0x258] sm:$0xff]
        %v622 = vld [vmem:[#allocation8 + $0x260] sm:$0xff]
        %v623 = vld [vmem:[#allocation8 + $0x268] sm:$0xff]
        %v624 = vld [vmem:[#allocation8 + $0x270] sm:$0xff]
        %v625 = vld [vmem:[#allocation8 + $0x278] sm:$0xff]
        %v626 = vld [vmem:[#allocation8 + $0x280] sm:$0xff]
        %v627 = vld [vmem:[#allocation8 + $0x288] sm:$0xff]
        %v628 = vld [vmem:[#allocation8 + $0x290] sm:$0xff]
        %v629 = vld [vmem:[#allocation8 + $0x298] sm:$0xff]
        %v630 = vld [vmem:[#allocation8 + $0x2a0] sm:$0xff]
        %v631 = vld [vmem:[#allocation8 + $0x2a8] sm:$0xff]
        %v632 = vld [vmem:[#allocation8 + $0x2b0] sm:$0xff]
        %v633 = vld [vmem:[#allocation8 + $0x2b8] sm:$0xff]
        %v634 = vld [vmem:[#allocation8 + $0x2c0] sm:$0xff]
        %v635 = vld [vmem:[#allocation8 + $0x2c8] sm:$0xff]
        %v636 = vld [vmem:[#allocation8 + $0x2d0] sm:$0xff]
        %v637 = vld [vmem:[#allocation8 + $0x2d8] sm:$0xff]
        %v638 = vld [vmem:[#allocation8 + $0x2e0] sm:$0xff]
        %v639 = vld [vmem:[#allocation8 + $0x2e8] sm:$0xff]
        %v640 = vld [vmem:[#allocation8 + $0x2f0] sm:$0xff]
        %v641 = vld [vmem:[#allocation8 + $0x2f8] sm:$0xff]
        %v642 = vld [vmem:[#allocation8 + $0x300] sm:$0xff]
        %v643 = vld [vmem:[#allocation8 + $0x308] sm:$0xff]
        %v644 = vld [vmem:[#allocation8 + $0x310] sm:$0xff]
        %v645 = vld [vmem:[#allocation8 + $0x318] sm:$0xff]
        %v646 = vld [vmem:[#allocation8 + $0x320] sm:$0xff]
        %v647 = vld [vmem:[#allocation8 + $0x328] sm:$0xff]
        %v648 = vld [vmem:[#allocation8 + $0x330] sm:$0xff]
        %v649 = vld [vmem:[#allocation8 + $0x338] sm:$0xff]
        %v650 = vld [vmem:[#allocation8 + $0x340] sm:$0xff]
        %v651 = vld [vmem:[#allocation8 + $0x348] sm:$0xff]
        %v652 = vld [vmem:[#allocation8 + $0x350] sm:$0xff]
        %v653 = vld [vmem:[#allocation8 + $0x358] sm:$0xff]
        %v654 = vld [vmem:[#allocation8 + $0x360] sm:$0xff]
        %v655 = vld [vmem:[#allocation8 + $0x368] sm:$0xff]
        %v656 = vld [vmem:[#allocation8 + $0x370] sm:$0xff]
        %v657 = vld [vmem:[#allocation8 + $0x378] sm:$0xff]
        %v658 = vld [vmem:[#allocation8 + $0x380] sm:$0xff]
        %v659 = vld [vmem:[#allocation8 + $0x388] sm:$0xff]
        %v660 = vld [vmem:[#allocation8 + $0x390] sm:$0xff]
        %v661 = vld [vmem:[#allocation8 + $0x398] sm:$0xff]
        %v662 = vld [vmem:[#allocation8 + $0x3a0] sm:$0xff]
        %v663 = vld [vmem:[#allocation8 + $0x3a8] sm:$0xff]
        %v664 = vld [vmem:[#allocation8 + $0x3b0] sm:$0xff]
        %v665 = vld [vmem:[#allocation8 + $0x3b8] sm:$0xff]
        %v666 = vld [vmem:[#allocation8 + $0x3c0] sm:$0xff]
        %v667 = vld [vmem:[#allocation8 + $0x3c8] sm:$0xff]
        %v668 = vld [vmem:[#allocation8 + $0x3d0] sm:$0xff]
        %v669 = vld [vmem:[#allocation8 + $0x3d8] sm:$0xff]
        %v670 = vld [vmem:[#allocation8 + $0x3e0] sm:$0xff]
        %v671 = vld [vmem:[#allocation8 + $0x3e8] sm:$0xff]
        %v672 = vld [vmem:[#allocation8 + $0x3f0] sm:$0xff]
        %v673 = vld [vmem:[#allocation8 + $0x3f8] sm:$0xff]
        %v678 = vunpack.c.l.b16 %v534
        %v679 = vunpack.c.h.b16 %v534
        %v680 = vunpack.c.l.b16 %v535
        %v681 = vunpack.c.h.b16 %v535
        %v682 = vunpack.c.l.b16 %v536
        %v683 = vunpack.c.h.b16 %v536
        %v684 = vunpack.c.l.b16 %v537
        %v685 = vunpack.c.h.b16 %v537
        %v686 = vpack.c.b16 %v682, %v678
        %v687 = vpack.c.b16 %v683, %v679
        %v688 = vpack.c.b16 %v684, %v680
        %v689 = vpack.c.b16 %v685, %v681
        %v822 = vunpack.c.l.b16 %v546
        %v823 = vunpack.c.h.b16 %v546
        %v824 = vunpack.c.l.b16 %v547
        %v825 = vunpack.c.h.b16 %v547
        %v826 = vunpack.c.l.b16 %v548
        %v827 = vunpack.c.h.b16 %v548
        %v828 = vunpack.c.l.b16 %v549
        %v829 = vunpack.c.h.b16 %v549
        %v830 = vunpack.c.l.b16 %v550
        %v831 = vunpack.c.h.b16 %v550
        %v832 = vunpack.c.l.b16 %v551
        %v833 = vunpack.c.h.b16 %v551
        %v834 = vunpack.c.l.b16 %v552
        %v835 = vunpack.c.h.b16 %v552
        %v836 = vunpack.c.l.b16 %v553
        %v837 = vunpack.c.h.b16 %v553
        %v838 = vunpack.c.l.b16 %v554
        %v839 = vunpack.c.h.b16 %v554
        %v840 = vunpack.c.l.b16 %v555
        %v841 = vunpack.c.h.b16 %v555
        %v842 = vunpack.c.l.b16 %v556
        %v843 = vunpack.c.h.b16 %v556
        %v844 = vunpack.c.l.b16 %v557
        %v845 = vunpack.c.h.b16 %v557
        %v846 = vunpack.c.l.b16 %v558
        %v847 = vunpack.c.h.b16 %v558
        %v848 = vunpack.c.l.b16 %v559
        %v849 = vunpack.c.h.b16 %v559
        %v850 = vunpack.c.l.b16 %v560
        %v851 = vunpack.c.h.b16 %v560
        %v852 = vunpack.c.l.b16 %v561
        %v853 = vunpack.c.h.b16 %v561
        %v854 = vunpack.c.l.b16 %v562
        %v855 = vunpack.c.h.b16 %v562
        %v856 = vunpack.c.l.b16 %v563
        %v857 = vunpack.c.h.b16 %v563
        %v858 = vunpack.c.l.b16 %v564
        %v859 = vunpack.c.h.b16 %v564
        %v860 = vunpack.c.l.b16 %v565
        %v861 = vunpack.c.h.b16 %v565
        %v862 = vunpack.c.l.b16 %v566
        %v863 = vunpack.c.h.b16 %v566
        %v864 = vunpack.c.l.b16 %v567
        %v865 = vunpack.c.h.b16 %v567
        %v866 = vunpack.c.l.b16 %v568
        %v867 = vunpack.c.h.b16 %v568
        %v868 = vunpack.c.l.b16 %v569
        %v869 = vunpack.c.h.b16 %v569
        %v870 = vunpack.c.l.b16 %v570
        %v871 = vunpack.c.h.b16 %v570
        %v872 = vunpack.c.l.b16 %v571
        %v873 = vunpack.c.h.b16 %v571
        %v874 = vunpack.c.l.b16 %v572
        %v875 = vunpack.c.h.b16 %v572
        %v876 = vunpack.c.l.b16 %v573
        %v877 = vunpack.c.h.b16 %v573
        %v878 = vunpack.c.l.b16 %v574
        %v879 = vunpack.c.h.b16 %v574
        %v880 = vunpack.c.l.b16 %v575
        %v881 = vunpack.c.h.b16 %v575
        %v882 = vunpack.c.l.b16 %v576
        %v883 = vunpack.c.h.b16 %v576
        %v884 = vunpack.c.l.b16 %v577
        %v885 = vunpack.c.h.b16 %v577
        %v886 = vunpack.c.l.b16 %v578
        %v887 = vunpack.c.h.b16 %v578
        %v888 = vunpack.c.l.b16 %v579
        %v889 = vunpack.c.h.b16 %v579
        %v890 = vunpack.c.l.b16 %v580
        %v891 = vunpack.c.h.b16 %v580
        %v892 = vunpack.c.l.b16 %v581
        %v893 = vunpack.c.h.b16 %v581
        %v894 = vunpack.c.l.b16 %v582
        %v895 = vunpack.c.h.b16 %v582
        %v896 = vunpack.c.l.b16 %v583
        %v897 = vunpack.c.h.b16 %v583
        %v898 = vunpack.c.l.b16 %v584
        %v899 = vunpack.c.h.b16 %v584
        %v900 = vunpack.c.l.b16 %v585
        %v901 = vunpack.c.h.b16 %v585
        %v902 = vunpack.c.l.b16 %v586
        %v903 = vunpack.c.h.b16 %v586
        %v904 = vunpack.c.l.b16 %v587
        %v905 = vunpack.c.h.b16 %v587
        %v906 = vunpack.c.l.b16 %v588
        %v907 = vunpack.c.h.b16 %v588
        %v908 = vunpack.c.l.b16 %v589
        %v909 = vunpack.c.h.b16 %v589
        %v910 = vunpack.c.l.b16 %v590
        %v911 = vunpack.c.h.b16 %v590
        %v912 = vunpack.c.l.b16 %v591
        %v913 = vunpack.c.h.b16 %v591
        %v914 = vunpack.c.l.b16 %v592
        %v915 = vunpack.c.h.b16 %v592
        %v916 = vunpack.c.l.b16 %v593
        %v917 = vunpack.c.h.b16 %v593
        %v918 = vunpack.c.l.b16 %v594
        %v919 = vunpack.c.h.b16 %v594
        %v920 = vunpack.c.l.b16 %v595
        %v921 = vunpack.c.h.b16 %v595
        %v922 = vunpack.c.l.b16 %v596
        %v923 = vunpack.c.h.b16 %v596
        %v924 = vunpack.c.l.b16 %v597
        %v925 = vunpack.c.h.b16 %v597
        %v926 = vunpack.c.l.b16 %v598
        %v927 = vunpack.c.h.b16 %v598
        %v928 = vunpack.c.l.b16 %v599
        %v929 = vunpack.c.h.b16 %v599
        %v930 = vunpack.c.l.b16 %v600
        %v931 = vunpack.c.h.b16 %v600
        %v932 = vunpack.c.l.b16 %v601
        %v933 = vunpack.c.h.b16 %v601
        %v934 = vunpack.c.l.b16 %v602
        %v935 = vunpack.c.h.b16 %v602
        %v936 = vunpack.c.l.b16 %v603
        %v937 = vunpack.c.h.b16 %v603
        %v938 = vunpack.c.l.b16 %v604
        %v939 = vunpack.c.h.b16 %v604
        %v940 = vunpack.c.l.b16 %v605
        %v941 = vunpack.c.h.b16 %v605
        %v942 = vunpack.c.l.b16 %v606
        %v943 = vunpack.c.h.b16 %v606
        %v944 = vunpack.c.l.b16 %v607
        %v945 = vunpack.c.h.b16 %v607
        %v946 = vunpack.c.l.b16 %v608
        %v947 = vunpack.c.h.b16 %v608
        %v948 = vunpack.c.l.b16 %v609
        %v949 = vunpack.c.h.b16 %v609
        %v950 = vunpack.c.l.b16 %v610
        %v951 = vunpack.c.h.b16 %v610
        %v952 = vunpack.c.l.b16 %v611
        %v953 = vunpack.c.h.b16 %v611
        %v954 = vunpack.c.l.b16 %v612
        %v955 = vunpack.c.h.b16 %v612
        %v956 = vunpack.c.l.b16 %v613
        %v957 = vunpack.c.h.b16 %v613
        %v958 = vunpack.c.l.b16 %v614
        %v959 = vunpack.c.h.b16 %v614
        %v960 = vunpack.c.l.b16 %v615
        %v961 = vunpack.c.h.b16 %v615
        %v962 = vunpack.c.l.b16 %v616
        %v963 = vunpack.c.h.b16 %v616
        %v964 = vunpack.c.l.b16 %v617
        %v965 = vunpack.c.h.b16 %v617
        %v966 = vunpack.c.l.b16 %v618
        %v967 = vunpack.c.h.b16 %v618
        %v968 = vunpack.c.l.b16 %v619
        %v969 = vunpack.c.h.b16 %v619
        %v970 = vunpack.c.l.b16 %v620
        %v971 = vunpack.c.h.b16 %v620
        %v972 = vunpack.c.l.b16 %v621
        %v973 = vunpack.c.h.b16 %v621
        %v974 = vunpack.c.l.b16 %v622
        %v975 = vunpack.c.h.b16 %v622
        %v976 = vunpack.c.l.b16 %v623
        %v977 = vunpack.c.h.b16 %v623
        %v978 = vunpack.c.l.b16 %v624
        %v979 = vunpack.c.h.b16 %v624
        %v980 = vunpack.c.l.b16 %v625
        %v981 = vunpack.c.h.b16 %v625
        %v982 = vunpack.c.l.b16 %v626
        %v983 = vunpack.c.h.b16 %v626
        %v984 = vunpack.c.l.b16 %v627
        %v985 = vunpack.c.h.b16 %v627
        %v986 = vunpack.c.l.b16 %v628
        %v987 = vunpack.c.h.b16 %v628
        %v988 = vunpack.c.l.b16 %v629
        %v989 = vunpack.c.h.b16 %v629
        %v990 = vunpack.c.l.b16 %v630
        %v991 = vunpack.c.h.b16 %v630
        %v992 = vunpack.c.l.b16 %v631
        %v993 = vunpack.c.h.b16 %v631
        %v994 = vunpack.c.l.b16 %v632
        %v995 = vunpack.c.h.b16 %v632
        %v996 = vunpack.c.l.b16 %v633
        %v997 = vunpack.c.h.b16 %v633
        %v998 = vunpack.c.l.b16 %v634
        %v999 = vunpack.c.h.b16 %v634
        %v1000 = vunpack.c.l.b16 %v635
        %v1001 = vunpack.c.h.b16 %v635
        %v1002 = vunpack.c.l.b16 %v636
        %v1003 = vunpack.c.h.b16 %v636
        %v1004 = vunpack.c.l.b16 %v637
        %v1005 = vunpack.c.h.b16 %v637
        %v1006 = vunpack.c.l.b16 %v638
        %v1007 = vunpack.c.h.b16 %v638
        %v1008 = vunpack.c.l.b16 %v639
        %v1009 = vunpack.c.h.b16 %v639
        %v1010 = vunpack.c.l.b16 %v640
        %v1011 = vunpack.c.h.b16 %v640
        %v1012 = vunpack.c.l.b16 %v641
        %v1013 = vunpack.c.h.b16 %v641
        %v1014 = vunpack.c.l.b16 %v642
        %v1015 = vunpack.c.h.b16 %v642
        %v1016 = vunpack.c.l.b16 %v643
        %v1017 = vunpack.c.h.b16 %v643
        %v1018 = vunpack.c.l.b16 %v644
        %v1019 = vunpack.c.h.b16 %v644
        %v1020 = vunpack.c.l.b16 %v645
        %v1021 = vunpack.c.h.b16 %v645
        %v1022 = vunpack.c.l.b16 %v646
        %v1023 = vunpack.c.h.b16 %v646
        %v1024 = vunpack.c.l.b16 %v647
        %v1025 = vunpack.c.h.b16 %v647
        %v1026 = vunpack.c.l.b16 %v648
        %v1027 = vunpack.c.h.b16 %v648
        %v1028 = vunpack.c.l.b16 %v649
        %v1029 = vunpack.c.h.b16 %v649
        %v1030 = vunpack.c.l.b16 %v650
        %v1031 = vunpack.c.h.b16 %v650
        %v1032 = vunpack.c.l.b16 %v651
        %v1033 = vunpack.c.h.b16 %v651
        %v1034 = vunpack.c.l.b16 %v652
        %v1035 = vunpack.c.h.b16 %v652
        %v1036 = vunpack.c.l.b16 %v653
        %v1037 = vunpack.c.h.b16 %v653
        %v1038 = vunpack.c.l.b16 %v654
        %v1039 = vunpack.c.h.b16 %v654
        %v1040 = vunpack.c.l.b16 %v655
        %v1041 = vunpack.c.h.b16 %v655
        %v1042 = vunpack.c.l.b16 %v656
        %v1043 = vunpack.c.h.b16 %v656
        %v1044 = vunpack.c.l.b16 %v657
        %v1045 = vunpack.c.h.b16 %v657
        %v1046 = vunpack.c.l.b16 %v658
        %v1047 = vunpack.c.h.b16 %v658
        %v1048 = vunpack.c.l.b16 %v659
        %v1049 = vunpack.c.h.b16 %v659
        %v1050 = vunpack.c.l.b16 %v660
        %v1051 = vunpack.c.h.b16 %v660
        %v1052 = vunpack.c.l.b16 %v661
        %v1053 = vunpack.c.h.b16 %v661
        %v1054 = vunpack.c.l.b16 %v662
        %v1055 = vunpack.c.h.b16 %v662
        %v1056 = vunpack.c.l.b16 %v663
        %v1057 = vunpack.c.h.b16 %v663
        %v1058 = vunpack.c.l.b16 %v664
        %v1059 = vunpack.c.h.b16 %v664
        %v1060 = vunpack.c.l.b16 %v665
        %v1061 = vunpack.c.h.b16 %v665
        %v1062 = vunpack.c.l.b16 %v666
        %v1063 = vunpack.c.h.b16 %v666
        %v1064 = vunpack.c.l.b16 %v667
        %v1065 = vunpack.c.h.b16 %v667
        %v1066 = vunpack.c.l.b16 %v668
        %v1067 = vunpack.c.h.b16 %v668
        %v1068 = vunpack.c.l.b16 %v669
        %v1069 = vunpack.c.h.b16 %v669
        %v1070 = vunpack.c.l.b16 %v670
        %v1071 = vunpack.c.h.b16 %v670
        %v1072 = vunpack.c.l.b16 %v671
        %v1073 = vunpack.c.h.b16 %v671
        %v1074 = vunpack.c.l.b16 %v672
        %v1075 = vunpack.c.h.b16 %v672
        %v1076 = vunpack.c.l.b16 %v673
        %v1077 = vunpack.c.h.b16 %v673
        %v1078 = vpack.c.b16 %v826, %v822
        %v1079 = vpack.c.b16 %v827, %v823
        %v1080 = vpack.c.b16 %v828, %v824
        %v1081 = vpack.c.b16 %v829, %v825
        %v1082 = vpack.c.b16 %v834, %v830
        %v1083 = vpack.c.b16 %v835, %v831
        %v1084 = vpack.c.b16 %v836, %v832
        %v1085 = vpack.c.b16 %v837, %v833
        %v1086 = vpack.c.b16 %v842, %v838
        %v1087 = vpack.c.b16 %v843, %v839
        %v1088 = vpack.c.b16 %v844, %v840
        %v1089 = vpack.c.b16 %v845, %v841
        %v1090 = vpack.c.b16 %v850, %v846
        %v1091 = vpack.c.b16 %v851, %v847
        %v1092 = vpack.c.b16 %v852, %v848
        %v1093 = vpack.c.b16 %v853, %v849
        %v1094 = vpack.c.b16 %v858, %v854
        %v1095 = vpack.c.b16 %v859, %v855
        %v1096 = vpack.c.b16 %v860, %v856
        %v1097 = vpack.c.b16 %v861, %v857
        %v1098 = vpack.c.b16 %v866, %v862
        %v1099 = vpack.c.b16 %v867, %v863
        %v1100 = vpack.c.b16 %v868, %v864
        %v1101 = vpack.c.b16 %v869, %v865
        %v1102 = vpack.c.b16 %v874, %v870
        %v1103 = vpack.c.b16 %v875, %v871
        %v1104 = vpack.c.b16 %v876, %v872
        %v1105 = vpack.c.b16 %v877, %v873
        %v1106 = vpack.c.b16 %v882, %v878
        %v1107 = vpack.c.b16 %v883, %v879
        %v1108 = vpack.c.b16 %v884, %v880
        %v1109 = vpack.c.b16 %v885, %v881
        %v1110 = vpack.c.b16 %v890, %v886
        %v1111 = vpack.c.b16 %v891, %v887
        %v1112 = vpack.c.b16 %v892, %v888
        %v1113 = vpack.c.b16 %v893, %v889
        %v1114 = vpack.c.b16 %v898, %v894
        %v1115 = vpack.c.b16 %v899, %v895
        %v1116 = vpack.c.b16 %v900, %v896
        %v1117 = vpack.c.b16 %v901, %v897
        %v1118 = vpack.c.b16 %v906, %v902
        %v1119 = vpack.c.b16 %v907, %v903
        %v1120 = vpack.c.b16 %v908, %v904
        %v1121 = vpack.c.b16 %v909, %v905
        %v1122 = vpack.c.b16 %v914, %v910
        %v1123 = vpack.c.b16 %v915, %v911
        %v1124 = vpack.c.b16 %v916, %v912
        %v1125 = vpack.c.b16 %v917, %v913
        %v1126 = vpack.c.b16 %v922, %v918
        %v1127 = vpack.c.b16 %v923, %v919
        %v1128 = vpack.c.b16 %v924, %v920
        %v1129 = vpack.c.b16 %v925, %v921
        %v1130 = vpack.c.b16 %v930, %v926
        %v1131 = vpack.c.b16 %v931, %v927
        %v1132 = vpack.c.b16 %v932, %v928
        %v1133 = vpack.c.b16 %v933, %v929
        %v1134 = vpack.c.b16 %v938, %v934
        %v1135 = vpack.c.b16 %v939, %v935
        %v1136 = vpack.c.b16 %v940, %v936
        %v1137 = vpack.c.b16 %v941, %v937
        %v1138 = vpack.c.b16 %v946, %v942
        %v1139 = vpack.c.b16 %v947, %v943
        %v1140 = vpack.c.b16 %v948, %v944
        %v1141 = vpack.c.b16 %v949, %v945
        %v1142 = vpack.c.b16 %v954, %v950
        %v1143 = vpack.c.b16 %v955, %v951
        %v1144 = vpack.c.b16 %v956, %v952
        %v1145 = vpack.c.b16 %v957, %v953
        %v1146 = vpack.c.b16 %v962, %v958
        %v1147 = vpack.c.b16 %v963, %v959
        %v1148 = vpack.c.b16 %v964, %v960
        %v1149 = vpack.c.b16 %v965, %v961
        %v1150 = vpack.c.b16 %v970, %v966
        %v1151 = vpack.c.b16 %v971, %v967
        %v1152 = vpack.c.b16 %v972, %v968
        %v1153 = vpack.c.b16 %v973, %v969
        %v1154 = vpack.c.b16 %v978, %v974
        %v1155 = vpack.c.b16 %v979, %v975
        %v1156 = vpack.c.b16 %v980, %v976
        %v1157 = vpack.c.b16 %v981, %v977
        %v1158 = vpack.c.b16 %v986, %v982
        %v1159 = vpack.c.b16 %v987, %v983
        %v1160 = vpack.c.b16 %v988, %v984
        %v1161 = vpack.c.b16 %v989, %v985
        %v1162 = vpack.c.b16 %v994, %v990
        %v1163 = vpack.c.b16 %v995, %v991
        %v1164 = vpack.c.b16 %v996, %v992
        %v1165 = vpack.c.b16 %v997, %v993
        %v1166 = vpack.c.b16 %v1002, %v998
        %v1167 = vpack.c.b16 %v1003, %v999
        %v1168 = vpack.c.b16 %v1004, %v1000
        %v1169 = vpack.c.b16 %v1005, %v1001
        %v1170 = vpack.c.b16 %v1010, %v1006
        %v1171 = vpack.c.b16 %v1011, %v1007
        %v1172 = vpack.c.b16 %v1012, %v1008
        %v1173 = vpack.c.b16 %v1013, %v1009
        %v1174 = vpack.c.b16 %v1018, %v1014
        %v1175 = vpack.c.b16 %v1019, %v1015
        %v1176 = vpack.c.b16 %v1020, %v1016
        %v1177 = vpack.c.b16 %v1021, %v1017
        %v1178 = vpack.c.b16 %v1026, %v1022
        %v1179 = vpack.c.b16 %v1027, %v1023
        %v1180 = vpack.c.b16 %v1028, %v1024
        %v1181 = vpack.c.b16 %v1029, %v1025
        %v1182 = vpack.c.b16 %v1034, %v1030
        %v1183 = vpack.c.b16 %v1035, %v1031
        %v1184 = vpack.c.b16 %v1036, %v1032
        %v1185 = vpack.c.b16 %v1037, %v1033
        %v1186 = vpack.c.b16 %v1042, %v1038
        %v1187 = vpack.c.b16 %v1043, %v1039
        %v1188 = vpack.c.b16 %v1044, %v1040
        %v1189 = vpack.c.b16 %v1045, %v1041
        %v1190 = vpack.c.b16 %v1050, %v1046
        %v1191 = vpack.c.b16 %v1051, %v1047
        %v1192 = vpack.c.b16 %v1052, %v1048
        %v1193 = vpack.c.b16 %v1053, %v1049
        %v1194 = vpack.c.b16 %v1058, %v1054
        %v1195 = vpack.c.b16 %v1059, %v1055
        %v1196 = vpack.c.b16 %v1060, %v1056
        %v1197 = vpack.c.b16 %v1061, %v1057
        %v1198 = vpack.c.b16 %v1066, %v1062
        %v1199 = vpack.c.b16 %v1067, %v1063
        %v1200 = vpack.c.b16 %v1068, %v1064
        %v1201 = vpack.c.b16 %v1069, %v1065
        %v1202 = vpack.c.b16 %v1074, %v1070
        %v1203 = vpack.c.b16 %v1075, %v1071
        %v1204 = vpack.c.b16 %v1076, %v1072
        %v1205 = vpack.c.b16 %v1077, %v1073
        %1334 = vmatpush.bf16.msra.mxu0 %v1106
        %1335 = vmatpush.bf16.msra.mxu0 %v1102
        %1336 = vmatpush.bf16.msra.mxu0 %v1098
        %1337 = vmatpush.bf16.msra.mxu0 %v1094
        %1338 = vmatpush.bf16.msra.mxu0 %v1090
        %1339 = vmatpush.bf16.msra.mxu0 %v1086
        %1340 = vmatpush.bf16.msra.mxu0 %v1082
        %1341 = vmatpush.bf16.msra.mxu0 %v1078
        %1342 = vmatmul.bf16.gmra.mxu0 %v686
        %v1343 = vpop.f32.mrf.mxu0
        %v1344 = vadd.f32 0.0, %v1343
        %v1345 = vpop.f32.mrf.mxu0
        %v1346 = vadd.f32 0.0, %v1345
        %1347 = vdwg.mxu0
        %1348 = vmatpush.bf16.msra.mxu0 %v1138
        %1349 = vmatpush.bf16.msra.mxu0 %v1134
        %1350 = vmatpush.bf16.msra.mxu0 %v1130
        %1351 = vmatpush.bf16.msra.mxu0 %v1126
        %1352 = vmatpush.bf16.msra.mxu0 %v1122
        %1353 = vmatpush.bf16.msra.mxu0 %v1118
        %1354 = vmatpush.bf16.msra.mxu0 %v1114
        %1355 = vmatpush.bf16.msra.mxu0 %v1110
        %1356 = vmatmul.bf16.gmra.mxu0 %v687
        %v1357 = vpop.f32.mrf.mxu0
        %v1358 = vadd.f32 %v1344, %v1357
        %v1359 = vpop.f32.mrf.mxu0
        %v1360 = vadd.f32 %v1346, %v1359
        %1361 = vdwg.mxu0
        %1362 = vmatpush.bf16.msra.mxu0 %v1170
        %1363 = vmatpush.bf16.msra.mxu0 %v1166
        %1364 = vmatpush.bf16.msra.mxu0 %v1162
        %1365 = vmatpush.bf16.msra.mxu0 %v1158
        %1366 = vmatpush.bf16.msra.mxu0 %v1154
        %1367 = vmatpush.bf16.msra.mxu0 %v1150
        %1368 = vmatpush.bf16.msra.mxu0 %v1146
        %1369 = vmatpush.bf16.msra.mxu0 %v1142
        %1370 = vmatmul.bf16.gmra.mxu0 %v688
        %v1371 = vpop.f32.mrf.mxu0
        %v1372 = vadd.f32 %v1358, %v1371
        %v1373 = vpop.f32.mrf.mxu0
        %v1374 = vadd.f32 %v1360, %v1373
        %1375 = vdwg.mxu0
        %1376 = vmatpush.bf16.msra.mxu0 %v1202
        %1377 = vmatpush.bf16.msra.mxu0 %v1198
        %1378 = vmatpush.bf16.msra.mxu0 %v1194
        %1379 = vmatpush.bf16.msra.mxu0 %v1190
        %1380 = vmatpush.bf16.msra.mxu0 %v1186
        %1381 = vmatpush.bf16.msra.mxu0 %v1182
        %1382 = vmatpush.bf16.msra.mxu0 %v1178
        %1383 = vmatpush.bf16.msra.mxu0 %v1174
        %1384 = vmatmul.bf16.gmra.mxu0 %v689
        %v1385 = vpop.f32.mrf.mxu0
        %v1386 = vadd.f32 %v1372, %v1385
        %v1387 = vpop.f32.mrf.mxu0
        %v1388 = vadd.f32 %v1374, %v1387
        %1389 = vdwg.mxu0
        %1390 = vmatpush.bf16.msra.mxu0 %v1107
        %1391 = vmatpush.bf16.msra.mxu0 %v1103
        %1392 = vmatpush.bf16.msra.mxu0 %v1099
        %1393 = vmatpush.bf16.msra.mxu0 %v1095
        %1394 = vmatpush.bf16.msra.mxu0 %v1091
        %1395 = vmatpush.bf16.msra.mxu0 %v1087
        %1396 = vmatpush.bf16.msra.mxu0 %v1083
        %1397 = vmatpush.bf16.msra.mxu0 %v1079
        %1398 = vmatmul.bf16.gmra.mxu0 %v686
        %v1399 = vpop.f32.mrf.mxu0
        %v1400 = vadd.f32 0.0, %v1399
        %v1401 = vpop.f32.mrf.mxu0
        %v1402 = vadd.f32 0.0, %v1401
        %1403 = vdwg.mxu0
        %1404 = vmatpush.bf16.msra.mxu0 %v1139
        %1405 = vmatpush.bf16.msra.mxu0 %v1135
        %1406 = vmatpush.bf16.msra.mxu0 %v1131
        %1407 = vmatpush.bf16.msra.mxu0 %v1127
        %1408 = vmatpush.bf16.msra.mxu0 %v1123
        %1409 = vmatpush.bf16.msra.mxu0 %v1119
        %1410 = vmatpush.bf16.msra.mxu0 %v1115
        %1411 = vmatpush.bf16.msra.mxu0 %v1111
        %1412 = vmatmul.bf16.gmra.mxu0 %v687
        %v1413 = vpop.f32.mrf.mxu0
        %v1414 = vadd.f32 %v1400, %v1413
        %v1415 = vpop.f32.mrf.mxu0
        %v1416 = vadd.f32 %v1402, %v1415
        %1417 = vdwg.mxu0
        %1418 = vmatpush.bf16.msra.mxu0 %v1171
        %1419 = vmatpush.bf16.msra.mxu0 %v1167
        %1420 = vmatpush.bf16.msra.mxu0 %v1163
        %1421 = vmatpush.bf16.msra.mxu0 %v1159
        %1422 = vmatpush.bf16.msra.mxu0 %v1155
        %1423 = vmatpush.bf16.msra.mxu0 %v1151
        %1424 = vmatpush.bf16.msra.mxu0 %v1147
        %1425 = vmatpush.bf16.msra.mxu0 %v1143
        %1426 = vmatmul.bf16.gmra.mxu0 %v688
        %v1427 = vpop.f32.mrf.mxu0
        %v1428 = vadd.f32 %v1414, %v1427
        %v1429 = vpop.f32.mrf.mxu0
        %v1430 = vadd.f32 %v1416, %v1429
        %1431 = vdwg.mxu0
        %1432 = vmatpush.bf16.msra.mxu0 %v1203
        %1433 = vmatpush.bf16.msra.mxu0 %v1199
        %1434 = vmatpush.bf16.msra.mxu0 %v1195
        %1435 = vmatpush.bf16.msra.mxu0 %v1191
        %1436 = vmatpush.bf16.msra.mxu0 %v1187
        %1437 = vmatpush.bf16.msra.mxu0 %v1183
        %1438 = vmatpush.bf16.msra.mxu0 %v1179
        %1439 = vmatpush.bf16.msra.mxu0 %v1175
        %1440 = vmatmul.bf16.gmra.mxu0 %v689
        %v1441 = vpop.f32.mrf.mxu0
        %v1442 = vadd.f32 %v1428, %v1441
        %v1443 = vpop.f32.mrf.mxu0
        %v1444 = vadd.f32 %v1430, %v1443
        %1445 = vdwg.mxu0
        %1446 = vmatpush.bf16.msra.mxu0 %v1108
        %1447 = vmatpush.bf16.msra.mxu0 %v1104
        %1448 = vmatpush.bf16.msra.mxu0 %v1100
        %1449 = vmatpush.bf16.msra.mxu0 %v1096
        %1450 = vmatpush.bf16.msra.mxu0 %v1092
        %1451 = vmatpush.bf16.msra.mxu0 %v1088
        %1452 = vmatpush.bf16.msra.mxu0 %v1084
        %1453 = vmatpush.bf16.msra.mxu0 %v1080
        %1454 = vmatmul.bf16.gmra.mxu0 %v686
        %v1455 = vpop.f32.mrf.mxu0
        %v1456 = vadd.f32 0.0, %v1455
        %v1457 = vpop.f32.mrf.mxu0
        %v1458 = vadd.f32 0.0, %v1457
        %1459 = vdwg.mxu0
        %1460 = vmatpush.bf16.msra.mxu0 %v1140
        %1461 = vmatpush.bf16.msra.mxu0 %v1136
        %1462 = vmatpush.bf16.msra.mxu0 %v1132
        %1463 = vmatpush.bf16.msra.mxu0 %v1128
        %1464 = vmatpush.bf16.msra.mxu0 %v1124
        %1465 = vmatpush.bf16.msra.mxu0 %v1120
        %1466 = vmatpush.bf16.msra.mxu0 %v1116
        %1467 = vmatpush.bf16.msra.mxu0 %v1112
        %1468 = vmatmul.bf16.gmra.mxu0 %v687
        %v1469 = vpop.f32.mrf.mxu0
        %v1470 = vadd.f32 %v1456, %v1469
        %v1471 = vpop.f32.mrf.mxu0
        %v1472 = vadd.f32 %v1458, %v1471
        %1473 = vdwg.mxu0
        %1474 = vmatpush.bf16.msra.mxu0 %v1172
        %1475 = vmatpush.bf16.msra.mxu0 %v1168
        %1476 = vmatpush.bf16.msra.mxu0 %v1164
        %1477 = vmatpush.bf16.msra.mxu0 %v1160
        %1478 = vmatpush.bf16.msra.mxu0 %v1156
        %1479 = vmatpush.bf16.msra.mxu0 %v1152
        %1480 = vmatpush.bf16.msra.mxu0 %v1148
        %1481 = vmatpush.bf16.msra.mxu0 %v1144
        %1482 = vmatmul.bf16.gmra.mxu0 %v688
        %v1483 = vpop.f32.mrf.mxu0
        %v1484 = vadd.f32 %v1470, %v1483
        %v1485 = vpop.f32.mrf.mxu0
        %v1486 = vadd.f32 %v1472, %v1485
        %1487 = vdwg.mxu0
        %1488 = vmatpush.bf16.msra.mxu0 %v1204
        %1489 = vmatpush.bf16.msra.mxu0 %v1200
        %1490 = vmatpush.bf16.msra.mxu0 %v1196
        %1491 = vmatpush.bf16.msra.mxu0 %v1192
        %1492 = vmatpush.bf16.msra.mxu0 %v1188
        %1493 = vmatpush.bf16.msra.mxu0 %v1184
        %1494 = vmatpush.bf16.msra.mxu0 %v1180
        %1495 = vmatpush.bf16.msra.mxu0 %v1176
        %1496 = vmatmul.bf16.gmra.mxu0 %v689
        %v1497 = vpop.f32.mrf.mxu0
        %v1498 = vadd.f32 %v1484, %v1497
        %v1499 = vpop.f32.mrf.mxu0
        %v1500 = vadd.f32 %v1486, %v1499
        %1501 = vdwg.mxu0
        %1502 = vmatpush.bf16.msra.mxu0 %v1109
        %1503 = vmatpush.bf16.msra.mxu0 %v1105
        %1504 = vmatpush.bf16.msra.mxu0 %v1101
        %1505 = vmatpush.bf16.msra.mxu0 %v1097
        %1506 = vmatpush.bf16.msra.mxu0 %v1093
        %1507 = vmatpush.bf16.msra.mxu0 %v1089
        %1508 = vmatpush.bf16.msra.mxu0 %v1085
        %1509 = vmatpush.bf16.msra.mxu0 %v1081
        %1510 = vmatmul.bf16.gmra.mxu0 %v686
        %v1511 = vpop.f32.mrf.mxu0
        %v1512 = vadd.f32 0.0, %v1511
        %v1513 = vpop.f32.mrf.mxu0
        %v1514 = vadd.f32 0.0, %v1513
        %1515 = vdwg.mxu0
        %1516 = vmatpush.bf16.msra.mxu0 %v1141
        %1517 = vmatpush.bf16.msra.mxu0 %v1137
        %1518 = vmatpush.bf16.msra.mxu0 %v1133
        %1519 = vmatpush.bf16.msra.mxu0 %v1129
        %1520 = vmatpush.bf16.msra.mxu0 %v1125
        %1521 = vmatpush.bf16.msra.mxu0 %v1121
        %1522 = vmatpush.bf16.msra.mxu0 %v1117
        %1523 = vmatpush.bf16.msra.mxu0 %v1113
        %1524 = vmatmul.bf16.gmra.mxu0 %v687
        %v1525 = vpop.f32.mrf.mxu0
        %v1526 = vadd.f32 %v1512, %v1525
        %v1527 = vpop.f32.mrf.mxu0
        %v1528 = vadd.f32 %v1514, %v1527
        %1529 = vdwg.mxu0
        %1530 = vmatpush.bf16.msra.mxu0 %v1173
        %1531 = vmatpush.bf16.msra.mxu0 %v1169
        %1532 = vmatpush.bf16.msra.mxu0 %v1165
        %1533 = vmatpush.bf16.msra.mxu0 %v1161
        %1534 = vmatpush.bf16.msra.mxu0 %v1157
        %1535 = vmatpush.bf16.msra.mxu0 %v1153
        %1536 = vmatpush.bf16.msra.mxu0 %v1149
        %1537 = vmatpush.bf16.msra.mxu0 %v1145
        %1538 = vmatmul.bf16.gmra.mxu0 %v688
        %v1539 = vpop.f32.mrf.mxu0
        %v1540 = vadd.f32 %v1526, %v1539
        %v1541 = vpop.f32.mrf.mxu0
        %v1542 = vadd.f32 %v1528, %v1541
        %1543 = vdwg.mxu0
        %1544 = vmatpush.bf16.msra.mxu0 %v1205
        %1545 = vmatpush.bf16.msra.mxu0 %v1201
        %1546 = vmatpush.bf16.msra.mxu0 %v1197
        %1547 = vmatpush.bf16.msra.mxu0 %v1193
        %1548 = vmatpush.bf16.msra.mxu0 %v1189
        %1549 = vmatpush.bf16.msra.mxu0 %v1185
        %1550 = vmatpush.bf16.msra.mxu0 %v1181
        %1551 = vmatpush.bf16.msra.mxu0 %v1177
        %1552 = vmatmul.bf16.gmra.mxu0 %v689
        %v1553 = vpop.f32.mrf.mxu0
        %v1554 = vadd.f32 %v1540, %v1553
        %v1555 = vpop.f32.mrf.mxu0
        %v1556 = vadd.f32 %v1542, %v1555
        %1557 = vdwg.mxu0
        %v1558 = vadd.f32 %v538, %v1386
        %v1559 = vadd.f32 %v539, %v1442
        %v1560 = vadd.f32 %v540, %v1498
        %v1561 = vadd.f32 %v541, %v1554
        %v1562 = vadd.f32 %v542, %v1388
        %v1563 = vadd.f32 %v543, %v1444
        %v1564 = vadd.f32 %v544, %v1500
        %v1565 = vadd.f32 %v545, %v1556
        %1566 = vst [vmem:[#allocation2] sm:$0xff] %v1558
        %1567 = vst [vmem:[#allocation2 + $0x8] sm:$0xff] %v1559
        %1568 = vst [vmem:[#allocation2 + $0x10] sm:$0xff] %v1560
        %1569 = vst [vmem:[#allocation2 + $0x18] sm:$0xff] %v1561
        %1570 = vst [vmem:[#allocation2 + $0x20] sm:$0xff] %v1562
        %1571 = vst [vmem:[#allocation2 + $0x28] sm:$0xff] %v1563
        %1572 = vst [vmem:[#allocation2 + $0x30] sm:$0xff] %v1564
        %1573 = vst [vmem:[#allocation2 + $0x38] sm:$0xff] %v1565
        %v1574 = vld [vmem:[#allocation3] sm:$0xff]
        %v1575 = vld [vmem:[#allocation3 + $0x8] sm:$0xff]
        %v1576 = vld [vmem:[#allocation3 + $0x10] sm:$0xff]
        %v1577 = vld [vmem:[#allocation3 + $0x18] sm:$0xff]
        %v1578 = vld [vmem:[#allocation10] sm:$0xff]
        %v1579 = vld [vmem:[#allocation10 + $0x8] sm:$0xff]
        %v1580 = vld [vmem:[#allocation10 + $0x10] sm:$0xff]
        %v1581 = vld [vmem:[#allocation10 + $0x18] sm:$0xff]
        %v1582 = vld [vmem:[#allocation10 + $0x20] sm:$0xff]
        %v1583 = vld [vmem:[#allocation10 + $0x28] sm:$0xff]
        %v1584 = vld [vmem:[#allocation10 + $0x30] sm:$0xff]
        %v1585 = vld [vmem:[#allocation10 + $0x38] sm:$0xff]
        %v1586 = vld [vmem:[#allocation10 + $0x40] sm:$0xff]
        %v1587 = vld [vmem:[#allocation10 + $0x48] sm:$0xff]
        %v1588 = vld [vmem:[#allocation10 + $0x50] sm:$0xff]
        %v1589 = vld [vmem:[#allocation10 + $0x58] sm:$0xff]
        %v1590 = vld [vmem:[#allocation10 + $0x60] sm:$0xff]
        %v1591 = vld [vmem:[#allocation10 + $0x68] sm:$0xff]
        %v1592 = vld [vmem:[#allocation10 + $0x70] sm:$0xff]
        %v1593 = vld [vmem:[#allocation10 + $0x78] sm:$0xff]
        %v1594 = vld [vmem:[#allocation10 + $0x80] sm:$0xff]
        %v1595 = vld [vmem:[#allocation10 + $0x88] sm:$0xff]
        %v1596 = vld [vmem:[#allocation10 + $0x90] sm:$0xff]
        %v1597 = vld [vmem:[#allocation10 + $0x98] sm:$0xff]
        %v1598 = vld [vmem:[#allocation10 + $0xa0] sm:$0xff]
        %v1599 = vld [vmem:[#allocation10 + $0xa8] sm:$0xff]
        %v1600 = vld [vmem:[#allocation10 + $0xb0] sm:$0xff]
        %v1601 = vld [vmem:[#allocation10 + $0xb8] sm:$0xff]
        %v1602 = vld [vmem:[#allocation10 + $0xc0] sm:$0xff]
        %v1603 = vld [vmem:[#allocation10 + $0xc8] sm:$0xff]
        %v1604 = vld [vmem:[#allocation10 + $0xd0] sm:$0xff]
        %v1605 = vld [vmem:[#allocation10 + $0xd8] sm:$0xff]
        %v1606 = vld [vmem:[#allocation10 + $0xe0] sm:$0xff]
        %v1607 = vld [vmem:[#allocation10 + $0xe8] sm:$0xff]
        %v1608 = vld [vmem:[#allocation10 + $0xf0] sm:$0xff]
        %v1609 = vld [vmem:[#allocation10 + $0xf8] sm:$0xff]
        %v1610 = vld [vmem:[#allocation10 + $0x100] sm:$0xff]
        %v1611 = vld [vmem:[#allocation10 + $0x108] sm:$0xff]
        %v1612 = vld [vmem:[#allocation10 + $0x110] sm:$0xff]
        %v1613 = vld [vmem:[#allocation10 + $0x118] sm:$0xff]
        %v1614 = vld [vmem:[#allocation10 + $0x120] sm:$0xff]
        %v1615 = vld [vmem:[#allocation10 + $0x128] sm:$0xff]
        %v1616 = vld [vmem:[#allocation10 + $0x130] sm:$0xff]
        %v1617 = vld [vmem:[#allocation10 + $0x138] sm:$0xff]
        %v1618 = vld [vmem:[#allocation10 + $0x140] sm:$0xff]
        %v1619 = vld [vmem:[#allocation10 + $0x148] sm:$0xff]
        %v1620 = vld [vmem:[#allocation10 + $0x150] sm:$0xff]
        %v1621 = vld [vmem:[#allocation10 + $0x158] sm:$0xff]
        %v1622 = vld [vmem:[#allocation10 + $0x160] sm:$0xff]
        %v1623 = vld [vmem:[#allocation10 + $0x168] sm:$0xff]
        %v1624 = vld [vmem:[#allocation10 + $0x170] sm:$0xff]
        %v1625 = vld [vmem:[#allocation10 + $0x178] sm:$0xff]
        %v1626 = vld [vmem:[#allocation10 + $0x180] sm:$0xff]
        %v1627 = vld [vmem:[#allocation10 + $0x188] sm:$0xff]
        %v1628 = vld [vmem:[#allocation10 + $0x190] sm:$0xff]
        %v1629 = vld [vmem:[#allocation10 + $0x198] sm:$0xff]
        %v1630 = vld [vmem:[#allocation10 + $0x1a0] sm:$0xff]
        %v1631 = vld [vmem:[#allocation10 + $0x1a8] sm:$0xff]
        %v1632 = vld [vmem:[#allocation10 + $0x1b0] sm:$0xff]
        %v1633 = vld [vmem:[#allocation10 + $0x1b8] sm:$0xff]
        %v1634 = vld [vmem:[#allocation10 + $0x1c0] sm:$0xff]
        %v1635 = vld [vmem:[#allocation10 + $0x1c8] sm:$0xff]
        %v1636 = vld [vmem:[#allocation10 + $0x1d0] sm:$0xff]
        %v1637 = vld [vmem:[#allocation10 + $0x1d8] sm:$0xff]
        %v1638 = vld [vmem:[#allocation10 + $0x1e0] sm:$0xff]
        %v1639 = vld [vmem:[#allocation10 + $0x1e8] sm:$0xff]
        %v1640 = vld [vmem:[#allocation10 + $0x1f0] sm:$0xff]
        %v1641 = vld [vmem:[#allocation10 + $0x1f8] sm:$0xff]
        %v1706 = vunpack.c.l.b16 %v1578
        %v1707 = vunpack.c.h.b16 %v1578
        %v1708 = vunpack.c.l.b16 %v1579
        %v1709 = vunpack.c.h.b16 %v1579
        %v1710 = vunpack.c.l.b16 %v1580
        %v1711 = vunpack.c.h.b16 %v1580
        %v1712 = vunpack.c.l.b16 %v1581
        %v1713 = vunpack.c.h.b16 %v1581
        %v1714 = vunpack.c.l.b16 %v1582
        %v1715 = vunpack.c.h.b16 %v1582
        %v1716 = vunpack.c.l.b16 %v1583
        %v1717 = vunpack.c.h.b16 %v1583
        %v1718 = vunpack.c.l.b16 %v1584
        %v1719 = vunpack.c.h.b16 %v1584
        %v1720 = vunpack.c.l.b16 %v1585
        %v1721 = vunpack.c.h.b16 %v1585
        %v1722 = vunpack.c.l.b16 %v1586
        %v1723 = vunpack.c.h.b16 %v1586
        %v1724 = vunpack.c.l.b16 %v1587
        %v1725 = vunpack.c.h.b16 %v1587
        %v1726 = vunpack.c.l.b16 %v1588
        %v1727 = vunpack.c.h.b16 %v1588
        %v1728 = vunpack.c.l.b16 %v1589
        %v1729 = vunpack.c.h.b16 %v1589
        %v1730 = vunpack.c.l.b16 %v1590
        %v1731 = vunpack.c.h.b16 %v1590
        %v1732 = vunpack.c.l.b16 %v1591
        %v1733 = vunpack.c.h.b16 %v1591
        %v1734 = vunpack.c.l.b16 %v1592
        %v1735 = vunpack.c.h.b16 %v1592
        %v1736 = vunpack.c.l.b16 %v1593
        %v1737 = vunpack.c.h.b16 %v1593
        %v1738 = vunpack.c.l.b16 %v1594
        %v1739 = vunpack.c.h.b16 %v1594
        %v1740 = vunpack.c.l.b16 %v1595
        %v1741 = vunpack.c.h.b16 %v1595
        %v1742 = vunpack.c.l.b16 %v1596
        %v1743 = vunpack.c.h.b16 %v1596
        %v1744 = vunpack.c.l.b16 %v1597
        %v1745 = vunpack.c.h.b16 %v1597
        %v1746 = vunpack.c.l.b16 %v1598
        %v1747 = vunpack.c.h.b16 %v1598
        %v1748 = vunpack.c.l.b16 %v1599
        %v1749 = vunpack.c.h.b16 %v1599
        %v1750 = vunpack.c.l.b16 %v1600
        %v1751 = vunpack.c.h.b16 %v1600
        %v1752 = vunpack.c.l.b16 %v1601
        %v1753 = vunpack.c.h.b16 %v1601
        %v1754 = vunpack.c.l.b16 %v1602
        %v1755 = vunpack.c.h.b16 %v1602
        %v1756 = vunpack.c.l.b16 %v1603
        %v1757 = vunpack.c.h.b16 %v1603
        %v1758 = vunpack.c.l.b16 %v1604
        %v1759 = vunpack.c.h.b16 %v1604
        %v1760 = vunpack.c.l.b16 %v1605
        %v1761 = vunpack.c.h.b16 %v1605
        %v1762 = vunpack.c.l.b16 %v1606
        %v1763 = vunpack.c.h.b16 %v1606
        %v1764 = vunpack.c.l.b16 %v1607
        %v1765 = vunpack.c.h.b16 %v1607
        %v1766 = vunpack.c.l.b16 %v1608
        %v1767 = vunpack.c.h.b16 %v1608
        %v1768 = vunpack.c.l.b16 %v1609
        %v1769 = vunpack.c.h.b16 %v1609
        %v1770 = vunpack.c.l.b16 %v1610
        %v1771 = vunpack.c.h.b16 %v1610
        %v1772 = vunpack.c.l.b16 %v1611
        %v1773 = vunpack.c.h.b16 %v1611
        %v1774 = vunpack.c.l.b16 %v1612
        %v1775 = vunpack.c.h.b16 %v1612
        %v1776 = vunpack.c.l.b16 %v1613
        %v1777 = vunpack.c.h.b16 %v1613
        %v1778 = vunpack.c.l.b16 %v1614
        %v1779 = vunpack.c.h.b16 %v1614
        %v1780 = vunpack.c.l.b16 %v1615
        %v1781 = vunpack.c.h.b16 %v1615
        %v1782 = vunpack.c.l.b16 %v1616
        %v1783 = vunpack.c.h.b16 %v1616
        %v1784 = vunpack.c.l.b16 %v1617
        %v1785 = vunpack.c.h.b16 %v1617
        %v1786 = vunpack.c.l.b16 %v1618
        %v1787 = vunpack.c.h.b16 %v1618
        %v1788 = vunpack.c.l.b16 %v1619
        %v1789 = vunpack.c.h.b16 %v1619
        %v1790 = vunpack.c.l.b16 %v1620
        %v1791 = vunpack.c.h.b16 %v1620
        %v1792 = vunpack.c.l.b16 %v1621
        %v1793 = vunpack.c.h.b16 %v1621
        %v1794 = vunpack.c.l.b16 %v1622
        %v1795 = vunpack.c.h.b16 %v1622
        %v1796 = vunpack.c.l.b16 %v1623
        %v1797 = vunpack.c.h.b16 %v1623
        %v1798 = vunpack.c.l.b16 %v1624
        %v1799 = vunpack.c.h.b16 %v1624
        %v1800 = vunpack.c.l.b16 %v1625
        %v1801 = vunpack.c.h.b16 %v1625
        %v1802 = vunpack.c.l.b16 %v1626
        %v1803 = vunpack.c.h.b16 %v1626
        %v1804 = vunpack.c.l.b16 %v1627
        %v1805 = vunpack.c.h.b16 %v1627
        %v1806 = vunpack.c.l.b16 %v1628
        %v1807 = vunpack.c.h.b16 %v1628
        %v1808 = vunpack.c.l.b16 %v1629
        %v1809 = vunpack.c.h.b16 %v1629
        %v1810 = vunpack.c.l.b16 %v1630
        %v1811 = vunpack.c.h.b16 %v1630
        %v1812 = vunpack.c.l.b16 %v1631
        %v1813 = vunpack.c.h.b16 %v1631
        %v1814 = vunpack.c.l.b16 %v1632
        %v1815 = vunpack.c.h.b16 %v1632
        %v1816 = vunpack.c.l.b16 %v1633
        %v1817 = vunpack.c.h.b16 %v1633
        %v1818 = vunpack.c.l.b16 %v1634
        %v1819 = vunpack.c.h.b16 %v1634
        %v1820 = vunpack.c.l.b16 %v1635
        %v1821 = vunpack.c.h.b16 %v1635
        %v1822 = vunpack.c.l.b16 %v1636
        %v1823 = vunpack.c.h.b16 %v1636
        %v1824 = vunpack.c.l.b16 %v1637
        %v1825 = vunpack.c.h.b16 %v1637
        %v1826 = vunpack.c.l.b16 %v1638
        %v1827 = vunpack.c.h.b16 %v1638
        %v1828 = vunpack.c.l.b16 %v1639
        %v1829 = vunpack.c.h.b16 %v1639
        %v1830 = vunpack.c.l.b16 %v1640
        %v1831 = vunpack.c.h.b16 %v1640
        %v1832 = vunpack.c.l.b16 %v1641
        %v1833 = vunpack.c.h.b16 %v1641
        %v1834 = vpack.c.b16 %v1708, %v1706
        %v1835 = vpack.c.b16 %v1709, %v1707
        %v1836 = vpack.c.b16 %v1712, %v1710
        %v1837 = vpack.c.b16 %v1713, %v1711
        %v1838 = vpack.c.b16 %v1716, %v1714
        %v1839 = vpack.c.b16 %v1717, %v1715
        %v1840 = vpack.c.b16 %v1720, %v1718
        %v1841 = vpack.c.b16 %v1721, %v1719
        %v1842 = vpack.c.b16 %v1724, %v1722
        %v1843 = vpack.c.b16 %v1725, %v1723
        %v1844 = vpack.c.b16 %v1728, %v1726
        %v1845 = vpack.c.b16 %v1729, %v1727
        %v1846 = vpack.c.b16 %v1732, %v1730
        %v1847 = vpack.c.b16 %v1733, %v1731
        %v1848 = vpack.c.b16 %v1736, %v1734
        %v1849 = vpack.c.b16 %v1737, %v1735
        %v1850 = vpack.c.b16 %v1740, %v1738
        %v1851 = vpack.c.b16 %v1741, %v1739
        %v1852 = vpack.c.b16 %v1744, %v1742
        %v1853 = vpack.c.b16 %v1745, %v1743
        %v1854 = vpack.c.b16 %v1748, %v1746
        %v1855 = vpack.c.b16 %v1749, %v1747
        %v1856 = vpack.c.b16 %v1752, %v1750
        %v1857 = vpack.c.b16 %v1753, %v1751
        %v1858 = vpack.c.b16 %v1756, %v1754
        %v1859 = vpack.c.b16 %v1757, %v1755
        %v1860 = vpack.c.b16 %v1760, %v1758
        %v1861 = vpack.c.b16 %v1761, %v1759
        %v1862 = vpack.c.b16 %v1764, %v1762
        %v1863 = vpack.c.b16 %v1765, %v1763
        %v1864 = vpack.c.b16 %v1768, %v1766
        %v1865 = vpack.c.b16 %v1769, %v1767
        %v1866 = vpack.c.b16 %v1772, %v1770
        %v1867 = vpack.c.b16 %v1773, %v1771
        %v1868 = vpack.c.b16 %v1776, %v1774
        %v1869 = vpack.c.b16 %v1777, %v1775
        %v1870 = vpack.c.b16 %v1780, %v1778
        %v1871 = vpack.c.b16 %v1781, %v1779
        %v1872 = vpack.c.b16 %v1784, %v1782
        %v1873 = vpack.c.b16 %v1785, %v1783
        %v1874 = vpack.c.b16 %v1788, %v1786
        %v1875 = vpack.c.b16 %v1789, %v1787
        %v1876 = vpack.c.b16 %v1792, %v1790
        %v1877 = vpack.c.b16 %v1793, %v1791
        %v1878 = vpack.c.b16 %v1796, %v1794
        %v1879 = vpack.c.b16 %v1797, %v1795
        %v1880 = vpack.c.b16 %v1800, %v1798
        %v1881 = vpack.c.b16 %v1801, %v1799
        %v1882 = vpack.c.b16 %v1804, %v1802
        %v1883 = vpack.c.b16 %v1805, %v1803
        %v1884 = vpack.c.b16 %v1808, %v1806
        %v1885 = vpack.c.b16 %v1809, %v1807
        %v1886 = vpack.c.b16 %v1812, %v1810
        %v1887 = vpack.c.b16 %v1813, %v1811
        %v1888 = vpack.c.b16 %v1816, %v1814
        %v1889 = vpack.c.b16 %v1817, %v1815
        %v1890 = vpack.c.b16 %v1820, %v1818
        %v1891 = vpack.c.b16 %v1821, %v1819
        %v1892 = vpack.c.b16 %v1824, %v1822
        %v1893 = vpack.c.b16 %v1825, %v1823
        %v1894 = vpack.c.b16 %v1828, %v1826
        %v1895 = vpack.c.b16 %v1829, %v1827
        %v1896 = vpack.c.b16 %v1832, %v1830
        %v1897 = vpack.c.b16 %v1833, %v1831
        %1962 = vmatpush.bf16.msra.mxu0 %v1848
        %1963 = vmatpush.bf16.msra.mxu0 %v1846
        %1964 = vmatpush.bf16.msra.mxu0 %v1844
        %1965 = vmatpush.bf16.msra.mxu0 %v1842
        %1966 = vmatpush.bf16.msra.mxu0 %v1840
        %1967 = vmatpush.bf16.msra.mxu0 %v1838
        %1968 = vmatpush.bf16.msra.mxu0 %v1836
        %1969 = vmatpush.bf16.msra.mxu0 %v1834
        %1970 = vmatmul.bf16.gmra.mxu0 %v686
        %v1971 = vpop.f32.mrf.mxu0
        %v1972 = vadd.f32 0.0, %v1971
        %v1973 = vpop.f32.mrf.mxu0
        %v1974 = vadd.f32 0.0, %v1973
        %1975 = vdwg.mxu0
        %1976 = vmatpush.bf16.msra.mxu0 %v1864
        %1977 = vmatpush.bf16.msra.mxu0 %v1862
        %1978 = vmatpush.bf16.msra.mxu0 %v1860
        %1979 = vmatpush.bf16.msra.mxu0 %v1858
        %1980 = vmatpush.bf16.msra.mxu0 %v1856
        %1981 = vmatpush.bf16.msra.mxu0 %v1854
        %1982 = vmatpush.bf16.msra.mxu0 %v1852
        %1983 = vmatpush.bf16.msra.mxu0 %v1850
        %1984 = vmatmul.bf16.gmra.mxu0 %v687
        %v1985 = vpop.f32.mrf.mxu0
        %v1986 = vadd.f32 %v1972, %v1985
        %v1987 = vpop.f32.mrf.mxu0
        %v1988 = vadd.f32 %v1974, %v1987
        %1989 = vdwg.mxu0
        %1990 = vmatpush.bf16.msra.mxu0 %v1880
        %1991 = vmatpush.bf16.msra.mxu0 %v1878
        %1992 = vmatpush.bf16.msra.mxu0 %v1876
        %1993 = vmatpush.bf16.msra.mxu0 %v1874
        %1994 = vmatpush.bf16.msra.mxu0 %v1872
        %1995 = vmatpush.bf16.msra.mxu0 %v1870
        %1996 = vmatpush.bf16.msra.mxu0 %v1868
        %1997 = vmatpush.bf16.msra.mxu0 %v1866
        %1998 = vmatmul.bf16.gmra.mxu0 %v688
        %v1999 = vpop.f32.mrf.mxu0
        %v2000 = vadd.f32 %v1986, %v1999
        %v2001 = vpop.f32.mrf.mxu0
        %v2002 = vadd.f32 %v1988, %v2001
        %2003 = vdwg.mxu0
        %2004 = vmatpush.bf16.msra.mxu0 %v1896
        %2005 = vmatpush.bf16.msra.mxu0 %v1894
        %2006 = vmatpush.bf16.msra.mxu0 %v1892
        %2007 = vmatpush.bf16.msra.mxu0 %v1890
        %2008 = vmatpush.bf16.msra.mxu0 %v1888
        %2009 = vmatpush.bf16.msra.mxu0 %v1886
        %2010 = vmatpush.bf16.msra.mxu0 %v1884
        %2011 = vmatpush.bf16.msra.mxu0 %v1882
        %2012 = vmatmul.bf16.gmra.mxu0 %v689
        %v2013 = vpop.f32.mrf.mxu0
        %v2014 = vadd.f32 %v2000, %v2013
        %v2015 = vpop.f32.mrf.mxu0
        %v2016 = vadd.f32 %v2002, %v2015
        %2017 = vdwg.mxu0
        %2018 = vmatpush.bf16.msra.mxu0 %v1849
        %2019 = vmatpush.bf16.msra.mxu0 %v1847
        %2020 = vmatpush.bf16.msra.mxu0 %v1845
        %2021 = vmatpush.bf16.msra.mxu0 %v1843
        %2022 = vmatpush.bf16.msra.mxu0 %v1841
        %2023 = vmatpush.bf16.msra.mxu0 %v1839
        %2024 = vmatpush.bf16.msra.mxu0 %v1837
        %2025 = vmatpush.bf16.msra.mxu0 %v1835
        %2026 = vmatmul.bf16.gmra.mxu0 %v686
        %v2027 = vpop.f32.mrf.mxu0
        %v2028 = vadd.f32 0.0, %v2027
        %v2029 = vpop.f32.mrf.mxu0
        %v2030 = vadd.f32 0.0, %v2029
        %2031 = vdwg.mxu0
        %2032 = vmatpush.bf16.msra.mxu0 %v1865
        %2033 = vmatpush.bf16.msra.mxu0 %v1863
        %2034 = vmatpush.bf16.msra.mxu0 %v1861
        %2035 = vmatpush.bf16.msra.mxu0 %v1859
        %2036 = vmatpush.bf16.msra.mxu0 %v1857
        %2037 = vmatpush.bf16.msra.mxu0 %v1855
        %2038 = vmatpush.bf16.msra.mxu0 %v1853
        %2039 = vmatpush.bf16.msra.mxu0 %v1851
        %2040 = vmatmul.bf16.gmra.mxu0 %v687
        %v2041 = vpop.f32.mrf.mxu0
        %v2042 = vadd.f32 %v2028, %v2041
        %v2043 = vpop.f32.mrf.mxu0
        %v2044 = vadd.f32 %v2030, %v2043
        %2045 = vdwg.mxu0
        %2046 = vmatpush.bf16.msra.mxu0 %v1881
        %2047 = vmatpush.bf16.msra.mxu0 %v1879
        %2048 = vmatpush.bf16.msra.mxu0 %v1877
        %2049 = vmatpush.bf16.msra.mxu0 %v1875
        %2050 = vmatpush.bf16.msra.mxu0 %v1873
        %2051 = vmatpush.bf16.msra.mxu0 %v1871
        %2052 = vmatpush.bf16.msra.mxu0 %v1869
        %2053 = vmatpush.bf16.msra.mxu0 %v1867
        %2054 = vmatmul.bf16.gmra.mxu0 %v688
        %v2055 = vpop.f32.mrf.mxu0
        %v2056 = vadd.f32 %v2042, %v2055
        %v2057 = vpop.f32.mrf.mxu0
        %v2058 = vadd.f32 %v2044, %v2057
        %2059 = vdwg.mxu0
        %2060 = vmatpush.bf16.msra.mxu0 %v1897
        %2061 = vmatpush.bf16.msra.mxu0 %v1895
        %2062 = vmatpush.bf16.msra.mxu0 %v1893
        %2063 = vmatpush.bf16.msra.mxu0 %v1891
        %2064 = vmatpush.bf16.msra.mxu0 %v1889
        %2065 = vmatpush.bf16.msra.mxu0 %v1887
        %2066 = vmatpush.bf16.msra.mxu0 %v1885
        %2067 = vmatpush.bf16.msra.mxu0 %v1883
        %2068 = vmatmul.bf16.gmra.mxu0 %v689
        %v2069 = vpop.f32.mrf.mxu0
        %v2070 = vadd.f32 %v2056, %v2069
        %v2071 = vpop.f32.mrf.mxu0
        %v2072 = vadd.f32 %v2058, %v2071
        %2073 = vdwg.mxu0
        %v2074 = vadd.f32 %v1574, %v2014
        %v2075 = vadd.f32 %v1575, %v2070
        %v2076 = vadd.f32 %v1576, %v2016
        %v2077 = vadd.f32 %v1577, %v2072
        %2078 = vst [vmem:[#allocation3] sm:$0xff] %v2074
        %2079 = vst [vmem:[#allocation3 + $0x8] sm:$0xff] %v2075
        %2080 = vst [vmem:[#allocation3 + $0x10] sm:$0xff] %v2076
        %2081 = vst [vmem:[#allocation3 + $0x18] sm:$0xff] %v2077
        %v2082 = vld [vmem:[#allocation4] sm:$0xff]
        %v2083 = vld [vmem:[#allocation4 + $0x8] sm:$0xff]
        %v2084 = vld [vmem:[#allocation4 + $0x10] sm:$0xff]
        %v2085 = vld [vmem:[#allocation4 + $0x18] sm:$0xff]
        %v2086 = vld [vmem:[#allocation11] sm:$0xff]
        %v2087 = vld [vmem:[#allocation11 + $0x8] sm:$0xff]
        %v2088 = vld [vmem:[#allocation11 + $0x10] sm:$0xff]
        %v2089 = vld [vmem:[#allocation11 + $0x18] sm:$0xff]
        %v2090 = vld [vmem:[#allocation11 + $0x20] sm:$0xff]
        %v2091 = vld [vmem:[#allocation11 + $0x28] sm:$0xff]
        %v2092 = vld [vmem:[#allocation11 + $0x30] sm:$0xff]
        %v2093 = vld [vmem:[#allocation11 + $0x38] sm:$0xff]
        %v2094 = vld [vmem:[#allocation11 + $0x40] sm:$0xff]
        %v2095 = vld [vmem:[#allocation11 + $0x48] sm:$0xff]
        %v2096 = vld [vmem:[#allocation11 + $0x50] sm:$0xff]
        %v2097 = vld [vmem:[#allocation11 + $0x58] sm:$0xff]
        %v2098 = vld [vmem:[#allocation11 + $0x60] sm:$0xff]
        %v2099 = vld [vmem:[#allocation11 + $0x68] sm:$0xff]
        %v2100 = vld [vmem:[#allocation11 + $0x70] sm:$0xff]
        %v2101 = vld [vmem:[#allocation11 + $0x78] sm:$0xff]
        %v2102 = vld [vmem:[#allocation11 + $0x80] sm:$0xff]
        %v2103 = vld [vmem:[#allocation11 + $0x88] sm:$0xff]
        %v2104 = vld [vmem:[#allocation11 + $0x90] sm:$0xff]
        %v2105 = vld [vmem:[#allocation11 + $0x98] sm:$0xff]
        %v2106 = vld [vmem:[#allocation11 + $0xa0] sm:$0xff]
        %v2107 = vld [vmem:[#allocation11 + $0xa8] sm:$0xff]
        %v2108 = vld [vmem:[#allocation11 + $0xb0] sm:$0xff]
        %v2109 = vld [vmem:[#allocation11 + $0xb8] sm:$0xff]
        %v2110 = vld [vmem:[#allocation11 + $0xc0] sm:$0xff]
        %v2111 = vld [vmem:[#allocation11 + $0xc8] sm:$0xff]
        %v2112 = vld [vmem:[#allocation11 + $0xd0] sm:$0xff]
        %v2113 = vld [vmem:[#allocation11 + $0xd8] sm:$0xff]
        %v2114 = vld [vmem:[#allocation11 + $0xe0] sm:$0xff]
        %v2115 = vld [vmem:[#allocation11 + $0xe8] sm:$0xff]
        %v2116 = vld [vmem:[#allocation11 + $0xf0] sm:$0xff]
        %v2117 = vld [vmem:[#allocation11 + $0xf8] sm:$0xff]
        %v2118 = vld [vmem:[#allocation11 + $0x100] sm:$0xff]
        %v2119 = vld [vmem:[#allocation11 + $0x108] sm:$0xff]
        %v2120 = vld [vmem:[#allocation11 + $0x110] sm:$0xff]
        %v2121 = vld [vmem:[#allocation11 + $0x118] sm:$0xff]
        %v2122 = vld [vmem:[#allocation11 + $0x120] sm:$0xff]
        %v2123 = vld [vmem:[#allocation11 + $0x128] sm:$0xff]
        %v2124 = vld [vmem:[#allocation11 + $0x130] sm:$0xff]
        %v2125 = vld [vmem:[#allocation11 + $0x138] sm:$0xff]
        %v2126 = vld [vmem:[#allocation11 + $0x140] sm:$0xff]
        %v2127 = vld [vmem:[#allocation11 + $0x148] sm:$0xff]
        %v2128 = vld [vmem:[#allocation11 + $0x150] sm:$0xff]
        %v2129 = vld [vmem:[#allocation11 + $0x158] sm:$0xff]
        %v2130 = vld [vmem:[#allocation11 + $0x160] sm:$0xff]
        %v2131 = vld [vmem:[#allocation11 + $0x168] sm:$0xff]
        %v2132 = vld [vmem:[#allocation11 + $0x170] sm:$0xff]
        %v2133 = vld [vmem:[#allocation11 + $0x178] sm:$0xff]
        %v2134 = vld [vmem:[#allocation11 + $0x180] sm:$0xff]
        %v2135 = vld [vmem:[#allocation11 + $0x188] sm:$0xff]
        %v2136 = vld [vmem:[#allocation11 + $0x190] sm:$0xff]
        %v2137 = vld [vmem:[#allocation11 + $0x198] sm:$0xff]
        %v2138 = vld [vmem:[#allocation11 + $0x1a0] sm:$0xff]
        %v2139 = vld [vmem:[#allocation11 + $0x1a8] sm:$0xff]
        %v2140 = vld [vmem:[#allocation11 + $0x1b0] sm:$0xff]
        %v2141 = vld [vmem:[#allocation11 + $0x1b8] sm:$0xff]
        %v2142 = vld [vmem:[#allocation11 + $0x1c0] sm:$0xff]
        %v2143 = vld [vmem:[#allocation11 + $0x1c8] sm:$0xff]
        %v2144 = vld [vmem:[#allocation11 + $0x1d0] sm:$0xff]
        %v2145 = vld [vmem:[#allocation11 + $0x1d8] sm:$0xff]
        %v2146 = vld [vmem:[#allocation11 + $0x1e0] sm:$0xff]
        %v2147 = vld [vmem:[#allocation11 + $0x1e8] sm:$0xff]
        %v2148 = vld [vmem:[#allocation11 + $0x1f0] sm:$0xff]
        %v2149 = vld [vmem:[#allocation11 + $0x1f8] sm:$0xff]
        %v2214 = vunpack.c.l.b16 %v2086
        %v2215 = vunpack.c.h.b16 %v2086
        %v2216 = vunpack.c.l.b16 %v2087
        %v2217 = vunpack.c.h.b16 %v2087
        %v2218 = vunpack.c.l.b16 %v2088
        %v2219 = vunpack.c.h.b16 %v2088
        %v2220 = vunpack.c.l.b16 %v2089
        %v2221 = vunpack.c.h.b16 %v2089
        %v2222 = vunpack.c.l.b16 %v2090
        %v2223 = vunpack.c.h.b16 %v2090
        %v2224 = vunpack.c.l.b16 %v2091
        %v2225 = vunpack.c.h.b16 %v2091
        %v2226 = vunpack.c.l.b16 %v2092
        %v2227 = vunpack.c.h.b16 %v2092
        %v2228 = vunpack.c.l.b16 %v2093
        %v2229 = vunpack.c.h.b16 %v2093
        %v2230 = vunpack.c.l.b16 %v2094
        %v2231 = vunpack.c.h.b16 %v2094
        %v2232 = vunpack.c.l.b16 %v2095
        %v2233 = vunpack.c.h.b16 %v2095
        %v2234 = vunpack.c.l.b16 %v2096
        %v2235 = vunpack.c.h.b16 %v2096
        %v2236 = vunpack.c.l.b16 %v2097
        %v2237 = vunpack.c.h.b16 %v2097
        %v2238 = vunpack.c.l.b16 %v2098
        %v2239 = vunpack.c.h.b16 %v2098
        %v2240 = vunpack.c.l.b16 %v2099
        %v2241 = vunpack.c.h.b16 %v2099
        %v2242 = vunpack.c.l.b16 %v2100
        %v2243 = vunpack.c.h.b16 %v2100
        %v2244 = vunpack.c.l.b16 %v2101
        %v2245 = vunpack.c.h.b16 %v2101
        %v2246 = vunpack.c.l.b16 %v2102
        %v2247 = vunpack.c.h.b16 %v2102
        %v2248 = vunpack.c.l.b16 %v2103
        %v2249 = vunpack.c.h.b16 %v2103
        %v2250 = vunpack.c.l.b16 %v2104
        %v2251 = vunpack.c.h.b16 %v2104
        %v2252 = vunpack.c.l.b16 %v2105
        %v2253 = vunpack.c.h.b16 %v2105
        %v2254 = vunpack.c.l.b16 %v2106
        %v2255 = vunpack.c.h.b16 %v2106
        %v2256 = vunpack.c.l.b16 %v2107
        %v2257 = vunpack.c.h.b16 %v2107
        %v2258 = vunpack.c.l.b16 %v2108
        %v2259 = vunpack.c.h.b16 %v2108
        %v2260 = vunpack.c.l.b16 %v2109
        %v2261 = vunpack.c.h.b16 %v2109
        %v2262 = vunpack.c.l.b16 %v2110
        %v2263 = vunpack.c.h.b16 %v2110
        %v2264 = vunpack.c.l.b16 %v2111
        %v2265 = vunpack.c.h.b16 %v2111
        %v2266 = vunpack.c.l.b16 %v2112
        %v2267 = vunpack.c.h.b16 %v2112
        %v2268 = vunpack.c.l.b16 %v2113
        %v2269 = vunpack.c.h.b16 %v2113
        %v2270 = vunpack.c.l.b16 %v2114
        %v2271 = vunpack.c.h.b16 %v2114
        %v2272 = vunpack.c.l.b16 %v2115
        %v2273 = vunpack.c.h.b16 %v2115
        %v2274 = vunpack.c.l.b16 %v2116
        %v2275 = vunpack.c.h.b16 %v2116
        %v2276 = vunpack.c.l.b16 %v2117
        %v2277 = vunpack.c.h.b16 %v2117
        %v2278 = vunpack.c.l.b16 %v2118
        %v2279 = vunpack.c.h.b16 %v2118
        %v2280 = vunpack.c.l.b16 %v2119
        %v2281 = vunpack.c.h.b16 %v2119
        %v2282 = vunpack.c.l.b16 %v2120
        %v2283 = vunpack.c.h.b16 %v2120
        %v2284 = vunpack.c.l.b16 %v2121
        %v2285 = vunpack.c.h.b16 %v2121
        %v2286 = vunpack.c.l.b16 %v2122
        %v2287 = vunpack.c.h.b16 %v2122
        %v2288 = vunpack.c.l.b16 %v2123
        %v2289 = vunpack.c.h.b16 %v2123
        %v2290 = vunpack.c.l.b16 %v2124
        %v2291 = vunpack.c.h.b16 %v2124
        %v2292 = vunpack.c.l.b16 %v2125
        %v2293 = vunpack.c.h.b16 %v2125
        %v2294 = vunpack.c.l.b16 %v2126
        %v2295 = vunpack.c.h.b16 %v2126
        %v2296 = vunpack.c.l.b16 %v2127
        %v2297 = vunpack.c.h.b16 %v2127
        %v2298 = vunpack.c.l.b16 %v2128
        %v2299 = vunpack.c.h.b16 %v2128
        %v2300 = vunpack.c.l.b16 %v2129
        %v2301 = vunpack.c.h.b16 %v2129
        %v2302 = vunpack.c.l.b16 %v2130
        %v2303 = vunpack.c.h.b16 %v2130
        %v2304 = vunpack.c.l.b16 %v2131
        %v2305 = vunpack.c.h.b16 %v2131
        %v2306 = vunpack.c.l.b16 %v2132
        %v2307 = vunpack.c.h.b16 %v2132
        %v2308 = vunpack.c.l.b16 %v2133
        %v2309 = vunpack.c.h.b16 %v2133
        %v2310 = vunpack.c.l.b16 %v2134
        %v2311 = vunpack.c.h.b16 %v2134
        %v2312 = vunpack.c.l.b16 %v2135
        %v2313 = vunpack.c.h.b16 %v2135
        %v2314 = vunpack.c.l.b16 %v2136
        %v2315 = vunpack.c.h.b16 %v2136
        %v2316 = vunpack.c.l.b16 %v2137
        %v2317 = vunpack.c.h.b16 %v2137
        %v2318 = vunpack.c.l.b16 %v2138
        %v2319 = vunpack.c.h.b16 %v2138
        %v2320 = vunpack.c.l.b16 %v2139
        %v2321 = vunpack.c.h.b16 %v2139
        %v2322 = vunpack.c.l.b16 %v2140
        %v2323 = vunpack.c.h.b16 %v2140
        %v2324 = vunpack.c.l.b16 %v2141
        %v2325 = vunpack.c.h.b16 %v2141
        %v2326 = vunpack.c.l.b16 %v2142
        %v2327 = vunpack.c.h.b16 %v2142
        %v2328 = vunpack.c.l.b16 %v2143
        %v2329 = vunpack.c.h.b16 %v2143
        %v2330 = vunpack.c.l.b16 %v2144
        %v2331 = vunpack.c.h.b16 %v2144
        %v2332 = vunpack.c.l.b16 %v2145
        %v2333 = vunpack.c.h.b16 %v2145
        %v2334 = vunpack.c.l.b16 %v2146
        %v2335 = vunpack.c.h.b16 %v2146
        %v2336 = vunpack.c.l.b16 %v2147
        %v2337 = vunpack.c.h.b16 %v2147
        %v2338 = vunpack.c.l.b16 %v2148
        %v2339 = vunpack.c.h.b16 %v2148
        %v2340 = vunpack.c.l.b16 %v2149
        %v2341 = vunpack.c.h.b16 %v2149
        %v2342 = vpack.c.b16 %v2216, %v2214
        %v2343 = vpack.c.b16 %v2217, %v2215
        %v2344 = vpack.c.b16 %v2220, %v2218
        %v2345 = vpack.c.b16 %v2221, %v2219
        %v2346 = vpack.c.b16 %v2224, %v2222
        %v2347 = vpack.c.b16 %v2225, %v2223
        %v2348 = vpack.c.b16 %v2228, %v2226
        %v2349 = vpack.c.b16 %v2229, %v2227
        %v2350 = vpack.c.b16 %v2232, %v2230
        %v2351 = vpack.c.b16 %v2233, %v2231
        %v2352 = vpack.c.b16 %v2236, %v2234
        %v2353 = vpack.c.b16 %v2237, %v2235
        %v2354 = vpack.c.b16 %v2240, %v2238
        %v2355 = vpack.c.b16 %v2241, %v2239
        %v2356 = vpack.c.b16 %v2244, %v2242
        %v2357 = vpack.c.b16 %v2245, %v2243
        %v2358 = vpack.c.b16 %v2248, %v2246
        %v2359 = vpack.c.b16 %v2249, %v2247
        %v2360 = vpack.c.b16 %v2252, %v2250
        %v2361 = vpack.c.b16 %v2253, %v2251
        %v2362 = vpack.c.b16 %v2256, %v2254
        %v2363 = vpack.c.b16 %v2257, %v2255
        %v2364 = vpack.c.b16 %v2260, %v2258
        %v2365 = vpack.c.b16 %v2261, %v2259
        %v2366 = vpack.c.b16 %v2264, %v2262
        %v2367 = vpack.c.b16 %v2265, %v2263
        %v2368 = vpack.c.b16 %v2268, %v2266
        %v2369 = vpack.c.b16 %v2269, %v2267
        %v2370 = vpack.c.b16 %v2272, %v2270
        %v2371 = vpack.c.b16 %v2273, %v2271
        %v2372 = vpack.c.b16 %v2276, %v2274
        %v2373 = vpack.c.b16 %v2277, %v2275
        %v2374 = vpack.c.b16 %v2280, %v2278
        %v2375 = vpack.c.b16 %v2281, %v2279
        %v2376 = vpack.c.b16 %v2284, %v2282
        %v2377 = vpack.c.b16 %v2285, %v2283
        %v2378 = vpack.c.b16 %v2288, %v2286
        %v2379 = vpack.c.b16 %v2289, %v2287
        %v2380 = vpack.c.b16 %v2292, %v2290
        %v2381 = vpack.c.b16 %v2293, %v2291
        %v2382 = vpack.c.b16 %v2296, %v2294
        %v2383 = vpack.c.b16 %v2297, %v2295
        %v2384 = vpack.c.b16 %v2300, %v2298
        %v2385 = vpack.c.b16 %v2301, %v2299
        %v2386 = vpack.c.b16 %v2304, %v2302
        %v2387 = vpack.c.b16 %v2305, %v2303
        %v2388 = vpack.c.b16 %v2308, %v2306
        %v2389 = vpack.c.b16 %v2309, %v2307
        %v2390 = vpack.c.b16 %v2312, %v2310
        %v2391 = vpack.c.b16 %v2313, %v2311
        %v2392 = vpack.c.b16 %v2316, %v2314
        %v2393 = vpack.c.b16 %v2317, %v2315
        %v2394 = vpack.c.b16 %v2320, %v2318
        %v2395 = vpack.c.b16 %v2321, %v2319
        %v2396 = vpack.c.b16 %v2324, %v2322
        %v2397 = vpack.c.b16 %v2325, %v2323
        %v2398 = vpack.c.b16 %v2328, %v2326
        %v2399 = vpack.c.b16 %v2329, %v2327
        %v2400 = vpack.c.b16 %v2332, %v2330
        %v2401 = vpack.c.b16 %v2333, %v2331
        %v2402 = vpack.c.b16 %v2336, %v2334
        %v2403 = vpack.c.b16 %v2337, %v2335
        %v2404 = vpack.c.b16 %v2340, %v2338
        %v2405 = vpack.c.b16 %v2341, %v2339
        %2470 = vmatpush.bf16.msra.mxu0 %v2356
        %2471 = vmatpush.bf16.msra.mxu0 %v2354
        %2472 = vmatpush.bf16.msra.mxu0 %v2352
        %2473 = vmatpush.bf16.msra.mxu0 %v2350
        %2474 = vmatpush.bf16.msra.mxu0 %v2348
        %2475 = vmatpush.bf16.msra.mxu0 %v2346
        %2476 = vmatpush.bf16.msra.mxu0 %v2344
        %2477 = vmatpush.bf16.msra.mxu0 %v2342
        %2478 = vmatmul.bf16.gmra.mxu0 %v686
        %v2479 = vpop.f32.mrf.mxu0
        %v2480 = vadd.f32 0.0, %v2479
        %v2481 = vpop.f32.mrf.mxu0
        %v2482 = vadd.f32 0.0, %v2481
        %2483 = vdwg.mxu0
        %2484 = vmatpush.bf16.msra.mxu0 %v2372
        %2485 = vmatpush.bf16.msra.mxu0 %v2370
        %2486 = vmatpush.bf16.msra.mxu0 %v2368
        %2487 = vmatpush.bf16.msra.mxu0 %v2366
        %2488 = vmatpush.bf16.msra.mxu0 %v2364
        %2489 = vmatpush.bf16.msra.mxu0 %v2362
        %2490 = vmatpush.bf16.msra.mxu0 %v2360
        %2491 = vmatpush.bf16.msra.mxu0 %v2358
        %2492 = vmatmul.bf16.gmra.mxu0 %v687
        %v2493 = vpop.f32.mrf.mxu0
        %v2494 = vadd.f32 %v2480, %v2493
        %v2495 = vpop.f32.mrf.mxu0
        %v2496 = vadd.f32 %v2482, %v2495
        %2497 = vdwg.mxu0
        %2498 = vmatpush.bf16.msra.mxu0 %v2388
        %2499 = vmatpush.bf16.msra.mxu0 %v2386
        %2500 = vmatpush.bf16.msra.mxu0 %v2384
        %2501 = vmatpush.bf16.msra.mxu0 %v2382
        %2502 = vmatpush.bf16.msra.mxu0 %v2380
        %2503 = vmatpush.bf16.msra.mxu0 %v2378
        %2504 = vmatpush.bf16.msra.mxu0 %v2376
        %2505 = vmatpush.bf16.msra.mxu0 %v2374
        %2506 = vmatmul.bf16.gmra.mxu0 %v688
        %v2507 = vpop.f32.mrf.mxu0
        %v2508 = vadd.f32 %v2494, %v2507
        %v2509 = vpop.f32.mrf.mxu0
        %v2510 = vadd.f32 %v2496, %v2509
        %2511 = vdwg.mxu0
        %2512 = vmatpush.bf16.msra.mxu0 %v2404
        %2513 = vmatpush.bf16.msra.mxu0 %v2402
        %2514 = vmatpush.bf16.msra.mxu0 %v2400
        %2515 = vmatpush.bf16.msra.mxu0 %v2398
        %2516 = vmatpush.bf16.msra.mxu0 %v2396
        %2517 = vmatpush.bf16.msra.mxu0 %v2394
        %2518 = vmatpush.bf16.msra.mxu0 %v2392
        %2519 = vmatpush.bf16.msra.mxu0 %v2390
        %2520 = vmatmul.bf16.gmra.mxu0 %v689
        %v2521 = vpop.f32.mrf.mxu0
        %v2522 = vadd.f32 %v2508, %v2521
        %v2523 = vpop.f32.mrf.mxu0
        %v2524 = vadd.f32 %v2510, %v2523
        %2525 = vdwg.mxu0
        %2526 = vmatpush.bf16.msra.mxu0 %v2357
        %2527 = vmatpush.bf16.msra.mxu0 %v2355
        %2528 = vmatpush.bf16.msra.mxu0 %v2353
        %2529 = vmatpush.bf16.msra.mxu0 %v2351
        %2530 = vmatpush.bf16.msra.mxu0 %v2349
        %2531 = vmatpush.bf16.msra.mxu0 %v2347
        %2532 = vmatpush.bf16.msra.mxu0 %v2345
        %2533 = vmatpush.bf16.msra.mxu0 %v2343
        %2534 = vmatmul.bf16.gmra.mxu0 %v686
        %v2535 = vpop.f32.mrf.mxu0
        %v2536 = vadd.f32 0.0, %v2535
        %v2537 = vpop.f32.mrf.mxu0
        %v2538 = vadd.f32 0.0, %v2537
        %2539 = vdwg.mxu0
        %2540 = vmatpush.bf16.msra.mxu0 %v2373
        %2541 = vmatpush.bf16.msra.mxu0 %v2371
        %2542 = vmatpush.bf16.msra.mxu0 %v2369
        %2543 = vmatpush.bf16.msra.mxu0 %v2367
        %2544 = vmatpush.bf16.msra.mxu0 %v2365
        %2545 = vmatpush.bf16.msra.mxu0 %v2363
        %2546 = vmatpush.bf16.msra.mxu0 %v2361
        %2547 = vmatpush.bf16.msra.mxu0 %v2359
        %2548 = vmatmul.bf16.gmra.mxu0 %v687
        %v2549 = vpop.f32.mrf.mxu0
        %v2550 = vadd.f32 %v2536, %v2549
        %v2551 = vpop.f32.mrf.mxu0
        %v2552 = vadd.f32 %v2538, %v2551
        %2553 = vdwg.mxu0
        %2554 = vmatpush.bf16.msra.mxu0 %v2389
        %2555 = vmatpush.bf16.msra.mxu0 %v2387
        %2556 = vmatpush.bf16.msra.mxu0 %v2385
        %2557 = vmatpush.bf16.msra.mxu0 %v2383
        %2558 = vmatpush.bf16.msra.mxu0 %v2381
        %2559 = vmatpush.bf16.msra.mxu0 %v2379
        %2560 = vmatpush.bf16.msra.mxu0 %v2377
        %2561 = vmatpush.bf16.msra.mxu0 %v2375
        %2562 = vmatmul.bf16.gmra.mxu0 %v688
        %v2563 = vpop.f32.mrf.mxu0
        %v2564 = vadd.f32 %v2550, %v2563
        %v2565 = vpop.f32.mrf.mxu0
        %v2566 = vadd.f32 %v2552, %v2565
        %2567 = vdwg.mxu0
        %2568 = vmatpush.bf16.msra.mxu0 %v2405
        %2569 = vmatpush.bf16.msra.mxu0 %v2403
        %2570 = vmatpush.bf16.msra.mxu0 %v2401
        %2571 = vmatpush.bf16.msra.mxu0 %v2399
        %2572 = vmatpush.bf16.msra.mxu0 %v2397
        %2573 = vmatpush.bf16.msra.mxu0 %v2395
        %2574 = vmatpush.bf16.msra.mxu0 %v2393
        %2575 = vmatpush.bf16.msra.mxu0 %v2391
        %2576 = vmatmul.bf16.gmra.mxu0 %v689
        %v2577 = vpop.f32.mrf.mxu0
        %v2578 = vadd.f32 %v2564, %v2577
        %v2579 = vpop.f32.mrf.mxu0
        %v2580 = vadd.f32 %v2566, %v2579
        %2581 = vdwg.mxu0
        %v2582 = vadd.f32 %v2082, %v2522
        %v2583 = vadd.f32 %v2083, %v2578
        %v2584 = vadd.f32 %v2084, %v2524
        %v2585 = vadd.f32 %v2085, %v2580
        %2586 = vst [vmem:[#allocation4] sm:$0xff] %v2582
        %2587 = vst [vmem:[#allocation4 + $0x8] sm:$0xff] %v2583
        %2588 = vst [vmem:[#allocation4 + $0x10] sm:$0xff] %v2584
        %2589 = vst [vmem:[#allocation4 + $0x18] sm:$0xff] %v2585
        // Predicated region
        $region73: #{tpu_custom_call.1} parent=43 // pred_check
          %p2590 = pneg %p514
        $region74: #{tpu_custom_call.1} parent=43 // pred_check_branch
          %2592 = sbr.rel (%p2590) target = $region76
        $region75: #{tpu_custom_call.1} parent=43 // pred_region
          %v2593 = vld [vmem:[#allocation13] sm:$0xff]
          %v2594 = vld [vmem:[#allocation13 + $0x8] sm:$0xff]
          %v2595 = vld [vmem:[#allocation14] sm:$0xff]
          %v2596 = vld [vmem:[#allocation14 + $0x8] sm:$0xff]
          %v2597 = vlaneseq
          %v2598 = vand.u32 %v2597, 127
          %vm2599 = vcmp.lt.s32.totalorder %v2598, 0
          %v2600 = vsub.s32 0, %v2598
          %v2601 = vsel %vm2599, %v2600, %v2598
          %v2602 = vshrl.u32 %v2601, 1
          %v2603 = vand.u32 %v2601, 1
          %v2604 = vsub.s32 0, %v2603
          %v2605 = vsel %vm2599, %v2604, %v2603
          %vm2606 = vcmp.ne.s32.totalorder %v2605, 0
          %vm2607 = vcmp.lt.s32.totalorder %v2605, 0
          %vm2608 = vmand %vm2607, %vm2606
          %v2609 = vadd.s32 %v2605, 2
          %v2610 = vsel %vm2608, %v2609, %v2605
          %vm2611 = vcmp.eq.s32.totalorder %v2610, 0
          %v2612 = vld [vmem:[#allocation2] sm:$0xff]
          %v2613 = vld [vmem:[#allocation2 + $0x8] sm:$0xff]
          %v2614 = vld [vmem:[#allocation2 + $0x10] sm:$0xff]
          %v2615 = vld [vmem:[#allocation2 + $0x18] sm:$0xff]
          %v2616 = vld [vmem:[#allocation2 + $0x20] sm:$0xff]
          %v2617 = vld [vmem:[#allocation2 + $0x28] sm:$0xff]
          %v2618 = vld [vmem:[#allocation2 + $0x30] sm:$0xff]
          %v2619 = vld [vmem:[#allocation2 + $0x38] sm:$0xff]
          %v2620 = vld [vmem:[#allocation3] sm:$0xff]
          %v2621 = vld [vmem:[#allocation3 + $0x8] sm:$0xff]
          %v2622 = vld [vmem:[#allocation3 + $0x10] sm:$0xff]
          %v2623 = vld [vmem:[#allocation3 + $0x18] sm:$0xff]
          %2624 = vrot.lane.b32.xlu0 %v2612, 127
          %v2625 = vpop.permute.xlu0 %2624
          %2626 = vrot.lane.b32.xlu0 %v2616, 127
          %v2627 = vpop.permute.xlu0 %2626
          %2628 = vrot.lane.b32.xlu0 %v2612, 1
          %v2629 = vpop.permute.xlu0 %2628
          %2630 = vrot.lane.b32.xlu0 %v2616, 1
          %v2631 = vpop.permute.xlu0 %2630
          %v2632 = vmul.f32 %v2612, %v2593
          %v2633 = vmul.f32 %v2616, %v2594
          %v2634 = vsel %vm2611, %v2625, %v2629
          %v2635 = vsel %vm2611, %v2627, %v2631
          %v2636 = vmul.f32 %v2634, %v2595
          %v2637 = vmul.f32 %v2635, %v2596
          %v2638 = vadd.f32 %v2632, %v2636
          %v2639 = vadd.f32 %v2633, %v2637
          %v2640 = vpack.c.bf16 %v2638, %v2638
          %v2641 = vpack.c.bf16 %v2639, %v2639
          %2642 = vst [vmem:[%s489] sm:$0xf] %v2640
          %2643 = vst [vmem:[%s489 + $0x10] sm:$0xf] %v2641
          %2644 = vrot.lane.b32.xlu0 %v2613, 127
          %v2645 = vpop.permute.xlu0 %2644
          %2646 = vrot.lane.b32.xlu0 %v2617, 127
          %v2647 = vpop.permute.xlu0 %2646
          %2648 = vrot.lane.b32.xlu0 %v2613, 1
          %v2649 = vpop.permute.xlu0 %2648
          %2650 = vrot.lane.b32.xlu0 %v2617, 1
          %v2651 = vpop.permute.xlu0 %2650
          %v2652 = vmul.f32 %v2613, %v2593
          %v2653 = vmul.f32 %v2617, %v2594
          %v2654 = vsel %vm2611, %v2645, %v2649
          %v2655 = vsel %vm2611, %v2647, %v2651
          %v2656 = vmul.f32 %v2654, %v2595
          %v2657 = vmul.f32 %v2655, %v2596
          %v2658 = vadd.f32 %v2652, %v2656
          %v2659 = vadd.f32 %v2653, %v2657
          %v2660 = vpack.c.bf16 %v2658, %v2658
          %v2661 = vpack.c.bf16 %v2659, %v2659
          %2662 = vst [vmem:[%s489 + $0x4] sm:$0xf] %v2660
          %2663 = vst [vmem:[%s489 + $0x14] sm:$0xf] %v2661
          %2664 = vrot.lane.b32.xlu0 %v2614, 127
          %v2665 = vpop.permute.xlu0 %2664
          %2666 = vrot.lane.b32.xlu0 %v2618, 127
          %v2667 = vpop.permute.xlu0 %2666
          %2668 = vrot.lane.b32.xlu0 %v2614, 1
          %v2669 = vpop.permute.xlu0 %2668
          %2670 = vrot.lane.b32.xlu0 %v2618, 1
          %v2671 = vpop.permute.xlu0 %2670
          %v2672 = vmul.f32 %v2614, %v2593
          %v2673 = vmul.f32 %v2618, %v2594
          %v2674 = vsel %vm2611, %v2665, %v2669
          %v2675 = vsel %vm2611, %v2667, %v2671
          %v2676 = vmul.f32 %v2674, %v2595
          %v2677 = vmul.f32 %v2675, %v2596
          %v2678 = vadd.f32 %v2672, %v2676
          %v2679 = vadd.f32 %v2673, %v2677
          %v2680 = vpack.c.bf16 %v2678, %v2678
          %v2681 = vpack.c.bf16 %v2679, %v2679
          %2682 = vst [vmem:[%s489 + $0x8] sm:$0xf] %v2680
          %2683 = vst [vmem:[%s489 + $0x18] sm:$0xf] %v2681
          %2684 = vrot.lane.b32.xlu0 %v2615, 127
          %v2685 = vpop.permute.xlu0 %2684
          %2686 = vrot.lane.b32.xlu0 %v2619, 127
          %v2687 = vpop.permute.xlu0 %2686
          %2688 = vrot.lane.b32.xlu0 %v2615, 1
          %v2689 = vpop.permute.xlu0 %2688
          %2690 = vrot.lane.b32.xlu0 %v2619, 1
          %v2691 = vpop.permute.xlu0 %2690
          %v2692 = vmul.f32 %v2615, %v2593
          %v2693 = vmul.f32 %v2619, %v2594
          %v2694 = vsel %vm2611, %v2685, %v2689
          %v2695 = vsel %vm2611, %v2687, %v2691
          %v2696 = vmul.f32 %v2694, %v2595
          %v2697 = vmul.f32 %v2695, %v2596
          %v2698 = vadd.f32 %v2692, %v2696
          %v2699 = vadd.f32 %v2693, %v2697
          %v2700 = vpack.c.bf16 %v2698, %v2698
          %v2701 = vpack.c.bf16 %v2699, %v2699
          %2702 = vst [vmem:[%s489 + $0xc] sm:$0xf] %v2700
          %2703 = vst [vmem:[%s489 + $0x1c] sm:$0xf] %v2701
          %2704 = vrot.lane.b32.xlu0 %v2620, 127
          %v2705 = vpop.permute.xlu0 %2704
          %2706 = vrot.lane.b32.xlu0 %v2622, 127
          %v2707 = vpop.permute.xlu0 %2706
          %2708 = vrot.lane.b32.xlu0 %v2620, 1
          %v2709 = vpop.permute.xlu0 %2708
          %2710 = vrot.lane.b32.xlu0 %v2622, 1
          %v2711 = vpop.permute.xlu0 %2710
          %v2712 = vmul.f32 %v2620, %v2593
          %v2713 = vmul.f32 %v2622, %v2594
          %v2714 = vsel %vm2611, %v2705, %v2709
          %v2715 = vsel %vm2611, %v2707, %v2711
          %v2716 = vmul.f32 %v2714, %v2595
          %v2717 = vmul.f32 %v2715, %v2596
          %v2718 = vadd.f32 %v2712, %v2716
          %v2719 = vadd.f32 %v2713, %v2717
          %v2720 = vpack.c.bf16 %v2718, %v2718
          %v2721 = vpack.c.bf16 %v2719, %v2719
          %2722 = vst [vmem:[%s496] sm:$0xf] %v2720
          %2723 = vst [vmem:[%s496 + $0x8] sm:$0xf] %v2721
          %2724 = vrot.lane.b32.xlu0 %v2621, 127
          %v2725 = vpop.permute.xlu0 %2724
          %2726 = vrot.lane.b32.xlu0 %v2623, 127
          %v2727 = vpop.permute.xlu0 %2726
          %2728 = vrot.lane.b32.xlu0 %v2621, 1
          %v2729 = vpop.permute.xlu0 %2728
          %2730 = vrot.lane.b32.xlu0 %v2623, 1
          %v2731 = vpop.permute.xlu0 %2730
          %v2732 = vmul.f32 %v2621, %v2593
          %v2733 = vmul.f32 %v2623, %v2594
          %v2734 = vsel %vm2611, %v2725, %v2729
          %v2735 = vsel %vm2611, %v2727, %v2731
          %v2736 = vmul.f32 %v2734, %v2595
          %v2737 = vmul.f32 %v2735, %v2596
          %v2738 = vadd.f32 %v2732, %v2736
          %v2739 = vadd.f32 %v2733, %v2737
          %v2740 = vpack.c.bf16 %v2738, %v2738
          %v2741 = vpack.c.bf16 %v2739, %v2739
          %2742 = vst [vmem:[%s496 + $0x4] sm:$0xf] %v2740
          %2743 = vst [vmem:[%s496 + $0xc] sm:$0xf] %v2741
          %v2744 = vld [vmem:[#allocation4] sm:$0xff]
          %v2745 = vld [vmem:[#allocation4 + $0x8] sm:$0xff]
          %v2746 = vld [vmem:[#allocation4 + $0x10] sm:$0xff]
          %v2747 = vld [vmem:[#allocation4 + $0x18] sm:$0xff]
          %v2748 = vpack.c.bf16 %v2745, %v2744
          %v2749 = vpack.c.bf16 %v2747, %v2746
          %2750 = vst [vmem:[%s503] sm:$0xff] %v2748
          %2751 = vst [vmem:[%s503 + $0x8] sm:$0xff] %v2749
        $region76: #{tpu_custom_call.1} parent=43 // pred_fallthru
          _
        %s2752 = sand.u32 %s221, 1
        %s2753 = scalar_lea.sflag [#allocation7], %s2752
        %s2754 = sand.u32 %s221, 1
        %s2755 = smul.addr %s2754, 32
        %s2756 = scalar_lea.vmem [#allocation16], %s2755
        %s2757 = sand.u32 %s32, 1
        %s2758 = scalar_lea.sflag [#allocation18], %s2757
        %s2759 = sand.u32 %s249, 1
        %s2760 = smul.addr %s2759, 16
        %s2761 = scalar_lea.vmem [#allocation17], %s2760
        %s2762 = sand.u32 %s32, 1
        %s2763 = scalar_lea.sflag [#allocation18], %s2762
        %s2764 = sand.u32 %s277, 1
        %s2765 = smul.addr %s2764, 16
        %s2766 = scalar_lea.vmem [#allocation19], %s2765
        // Predicated region
        $region77: #{tpu_custom_call.1} parent=43 // pred_check
          %p2767 = pneg %p231
        $region78: #{tpu_custom_call.1} parent=43 // pred_check_branch
          %2769 = sbr.rel (%p2767) target = $region80
        $region79: #{tpu_custom_call.1} parent=43 // pred_region
          %s2770 = smul.u32 2, %s38
          %2772 = vsyncadd %s2753, 0
          %s2773 = smul.addr %s2770, 4
          %s2774 = smul.addr %s37, 8
          %s2775 = sadd.s32 %s2773, %s2774
          %s2776 = smul.addr %s2775, 4
          %s2777 = scalar_lea.hbm %s6, %s2776
          %s2778 = sshll.u32 %s2756, 4
          %s2779 = int_to_ptr.vmem [resolvable:$true] %s2778
          %s2780 = sshll.u32 %s2777, 4
          %s2781 = int_to_ptr.hbm [resolvable:$true] %s2780
          %2786 = dma.vmem_to_hbm [thread:$0]  %s2779, 512, %s2781, %s2753, 256, 256, 16
        $region80: #{tpu_custom_call.1} parent=43 // pred_fallthru
          _
        // Predicated region
        $region81: #{tpu_custom_call.1} parent=43 // pred_check
          %p2787 = pneg %p259
        $region82: #{tpu_custom_call.1} parent=43 // pred_check_branch
          %2789 = sbr.rel (%p2787) target = $region84
        $region83: #{tpu_custom_call.1} parent=43 // pred_region
          %s2790 = smul.u32 2, %s38
          %2792 = vsyncadd %s2758, 0
          %s2793 = smul.addr %s2790, 2
          %s2794 = smul.addr %s37, 4
          %s2795 = sadd.s32 %s2793, %s2794
          %s2796 = smul.addr %s2795, 4
          %s2797 = scalar_lea.hbm %s7, %s2796
          %s2798 = sshll.u32 %s2761, 4
          %s2799 = int_to_ptr.vmem [resolvable:$true] %s2798
          %s2800 = sshll.u32 %s2797, 4
          %s2801 = int_to_ptr.hbm [resolvable:$true] %s2800
          %2806 = dma.vmem_to_hbm [thread:$0]  %s2799, 256, %s2801, %s2758, 128, 128, 8
        $region84: #{tpu_custom_call.1} parent=43 // pred_fallthru
          _
        // Predicated region
        $region85: #{tpu_custom_call.1} parent=43 // pred_check
          %p2807 = pneg %p287
        $region86: #{tpu_custom_call.1} parent=43 // pred_check_branch
          %2809 = sbr.rel (%p2807) target = $region88
        $region87: #{tpu_custom_call.1} parent=43 // pred_region
          %s2810 = smul.u32 2, %s38
          %2812 = vsyncadd %s2763, 0
          %s2813 = smul.addr %s2810, 2
          %s2814 = smul.addr %s37, 4
          %s2815 = sadd.s32 %s2813, %s2814
          %s2816 = smul.addr %s2815, 4
          %s2817 = scalar_lea.hbm %s8, %s2816
          %s2818 = sshll.u32 %s2766, 4
          %s2819 = int_to_ptr.vmem [resolvable:$true] %s2818
          %s2820 = sshll.u32 %s2817, 4
          %s2821 = int_to_ptr.hbm [resolvable:$true] %s2820
          %2826 = dma.vmem_to_hbm [thread:$0]  %s2819, 256, %s2821, %s2763, 128, 128, 8
        $region88: #{tpu_custom_call.1} parent=43 // pred_fallthru
          _
      $region44: #{tpu_custom_call.1} parent=5 // pred_fallthru
        _
      %p2827 = scmp.le.s32.totalorder 2, %s27
      // Predicated region
      $region89: #{tpu_custom_call.1} parent=5 // pred_check
        %p2828 = pneg %p2827
      $region90: #{tpu_custom_call.1} parent=5 // pred_check_branch
        %2830 = sbr.rel (%p2828) target = $region92
      $region91: #{tpu_custom_call.1} parent=5 // pred_region
        %s2831 = ssub.s32 %s27, 2
        // Predicated region
        $region93: #{tpu_custom_call.1} parent=91 // pred_check
          %p2832 = pneg %p237
        $region94: #{tpu_custom_call.1} parent=91 // pred_check_branch
          %2834 = sbr.rel (%p2832) target = $region96
        $region95: #{tpu_custom_call.1} parent=91 // pred_region
          %s2835 = sand.u32 %s222, 1
          %s2836 = scalar_lea.sflag [#allocation7], %s2835
          %s2837 = sand.u32 %s222, 1
          %s2838 = smul.addr %s2837, 32
          %s2839 = scalar_lea.vmem [#allocation16], %s2838
          %2841 = dma.done %s2836, 512
        $region96: #{tpu_custom_call.1} parent=91 // pred_fallthru
          _
        // Predicated region
        $region97: #{tpu_custom_call.1} parent=91 // pred_check
          %p2842 = pneg %p265
        $region98: #{tpu_custom_call.1} parent=91 // pred_check_branch
          %2844 = sbr.rel (%p2842) target = $region100
        $region99: #{tpu_custom_call.1} parent=91 // pred_region
          %s2845 = sand.u32 %s33, 1
          %s2846 = scalar_lea.sflag [#allocation18], %s2845
          %s2847 = sand.u32 %s250, 1
          %s2848 = smul.addr %s2847, 16
          %s2849 = scalar_lea.vmem [#allocation17], %s2848
          %2851 = dma.done %s2846, 256
        $region100: #{tpu_custom_call.1} parent=91 // pred_fallthru
          _
        // Predicated region
        $region101: #{tpu_custom_call.1} parent=91 // pred_check
          %p2852 = pneg %p293
        $region102: #{tpu_custom_call.1} parent=91 // pred_check_branch
          %2854 = sbr.rel (%p2852) target = $region104
        $region103: #{tpu_custom_call.1} parent=91 // pred_region
          %s2855 = sand.u32 %s33, 1
          %s2856 = scalar_lea.sflag [#allocation18], %s2855
          %s2857 = sand.u32 %s278, 1
          %s2858 = smul.addr %s2857, 16
          %s2859 = scalar_lea.vmem [#allocation19], %s2858
          %2861 = dma.done %s2856, 256
        $region104: #{tpu_custom_call.1} parent=91 // pred_fallthru
          _
      $region92: #{tpu_custom_call.1} parent=5 // pred_fallthru
        _
    $region6: #{tpu_custom_call.1} parent=1 // loop_footer
      %s31 = sadd.s32 1, %s27
    $region7: #{tpu_custom_call.1} parent=1 // loop_footer_branch
      %26 = sbr.rel target = $region3
    $region8: #{tpu_custom_call.1} parent=1 // loop_exit
      _
    %2862 = vsyncpa [#allocation6], 1
    %s2863 = scalar_lea.sflag [#allocation6], 1
    %2864 = vsyncpa %s2863, 1
    %2865 = vsyncpa [#allocation9], 1
    %2866 = vsyncpa [#allocation12], 1
    %2867 = vsyncpa [#allocation15], 1
    %2868 = vsyncpa [#allocation7], 1
    %s2869 = scalar_lea.sflag [#allocation7], 1
    %2870 = vsyncpa %s2869, 1
    %2871 = vsyncpa [#allocation18], 1
    %s2872 = scalar_lea.sflag [#allocation18], 1
    %2873 = vsyncpa %s2872, 1

</llo_original>
